<compile_context>
chip_gen: v5e
topology: v5e:2x2
jax: 0.10.0
libtpu: 0.0.40
codegen_flags: <defaults>
</compile_context>

<pallas_src>
import functools

import jax
import jax.numpy as jnp
from jax.experimental import pallas as pl
from jax.experimental.pallas import tpu as pltpu

train_size = (1, 3, 256, 256)  # matches the PyTorch module


# ----------------------------------------------------------------------------
# Host-side helpers
# ----------------------------------------------------------------------------
def _box_matrix(size, k, out_len, pad_before):
    """M[i, r] = 1 if input index r lies in the box window of output index i.

    Output index i maps to window start clamp(i - pad_before, 0, out_len - 1),
    window [start, start + k).  Reproduces the stride-1 box sum followed by
    replicate padding back to `size` (AvgPool2d auto_pad path).  Entries are
    exactly 0/1 (representable exactly in bf16).
    """
    starts = jnp.clip(jnp.arange(size) - pad_before, 0, out_len - 1)
    r = jnp.arange(size)[None, :]
    s = starts[:, None]
    return ((r >= s) & (r < s + k)).astype(jnp.float32)


def _pool_params(H, W, base_size):
    if isinstance(base_size, int):
        base_size = (base_size, base_size)
    # kernel_size computed as in AvgPool2d.forward; guarded against k == 0.
    k1 = max(1, min(H, H * base_size[0] // train_size[-2]))
    k2 = max(1, min(W, W * base_size[1] // train_size[-1]))
    out_h, out_w = H + 1 - k1, W + 1 - k2
    pad_top, pad_left = (H - out_h) // 2, (W - out_w) // 2
    return k1, k2, out_h, out_w, pad_top, pad_left


def _pick_cb(C, W):
    """Channels packed per grid step so cb*W is lane-dense (multiple of 128)."""
    if W % 128 == 0:
        return 1
    # smallest suitable divisor of C: keeps kron(I_cb, B^T) waste / VMEM low.
    for cb in range(1, C + 1):
        if C % cb == 0 and (cb * W) % 128 == 0 and cb * W <= 1024:
            return cb
    # fallback: best effort, largest divisor with <= 128 lanes.
    for cb in range(C, 0, -1):
        if C % cb == 0 and cb * W <= 128:
            return cb
    return 1


def _pick_row_tile(H):
    """Row-tile the output: smaller per-step VMEM, and an even parallel grid
    extent at train_size (v7x runs 2 TensorCores)."""
    if H > 128 and H % 128 == 0:
        return 128
    return H


# ----------------------------------------------------------------------------
# Pallas kernel: one (n, channel-group) x (row-tile) block per grid step.
# ----------------------------------------------------------------------------
def _box_kernel(a_ref, bt_ref, *rest, cb, W, TM, lanes, scale, eps,
                affine, normalize):
    if affine:
        w_ref, b_ref, x_ref, o_ref = rest
    else:
        x_ref, o_ref = rest

    H = x_ref.shape[2]
    r = pl.program_id(1)

    xb = x_ref[0].astype(jnp.float32)                       # (cb, H, W)
    if cb > 1:
        # channels -> lanes relayout in VMEM (static slices + lane concat);
        # replaces the old host-side transpose (full-tensor HBM round trip).
        xp = jnp.concatenate([xb[c] for c in range(cb)], axis=1)   # (H, cb*W)
    else:
        xp = xb[0]                                                  # (H, W)

    # Row pass (dense A, exact 0/1): fuse [x | x*x] — no wasted flops here.
    op = jnp.concatenate([xp, xp * xp], axis=1) if normalize else xp
    t = jnp.dot(a_ref[...], op.astype(a_ref.dtype),
                preferred_element_type=jnp.float32)          # (TM, nops*lanes)

    # Column pass: ONE block-diagonal kron(I_cb, B^T) shared by the x and x*x
    # halves (no kron(I_2cb, ...) waste); t stays f32 so a bf16 Bt does not
    # round the accumulator.  1/(k1*k2) applied once in f32 (bf16-safe).
    bt = bt_ref[...]
    if normalize:
        mean_x = jnp.dot(t[:, :lanes], bt,
                         preferred_element_type=jnp.float32) * scale
        mean_xx = jnp.dot(t[:, lanes:], bt,
                          preferred_element_type=jnp.float32) * scale
        if TM == H:
            x_rows = xp
        elif cb == 1:
            x_rows = x_ref[0, 0, pl.ds(pl.multiple_of(r * TM, TM), TM),
                           :].astype(jnp.float32)
        else:  # cb > 1 with row tiling (rare: small W implies small H)
            x_rows = jax.lax.dynamic_slice_in_dim(xp, r * TM, TM, axis=0)
        var = jnp.maximum(mean_xx - mean_x * mean_x, 0.0)    # guard cancellation
        y = (x_rows - mean_x) * jax.lax.rsqrt(var + eps)
        if affine:                                           # gated out if identity
            y = y * w_ref[0] + b_ref[0]
    else:
        y = jnp.dot(t, bt, preferred_element_type=jnp.float32) * scale

    # lanes -> channels on store, directly into the NCHW output block.
    if cb > 1:
        for c in range(cb):
            o_ref[0, c] = y[:, c * W:(c + 1) * W].astype(o_ref.dtype)
    else:
        o_ref[0, 0] = y.astype(o_ref.dtype)


# ----------------------------------------------------------------------------
# Shared wrapper
# ----------------------------------------------------------------------------
def _box_call(x, weight, bias, *, base_size, eps, normalize, matmul_dtype):
    N, C, H, W = x.shape
    k1, k2, out_h, out_w, pad_top, pad_left = _pool_params(H, W, base_size)

    cb = _pick_cb(C, W)
    G = C // cb
    L = cb * W                      # packed lane width
    TM = _pick_row_tile(H)
    R = H // TM
    NG = N * G

    # Exact 0/1 matrices; area scale applied on the f32 accumulator in-kernel.
    A = _box_matrix(H, k1, out_h, pad_top).astype(matmul_dtype)              # (H, H)
    B = _box_matrix(W, k2, out_w, pad_left)
    Bt = jnp.kron(jnp.eye(cb, dtype=jnp.float32), B.T).astype(matmul_dtype)  # (L, L)
    scale = 1.0 / float(k1 * k2)

    # Merge-only reshape of NCHW (no transpose -> no extra HBM round trip).
    xr = x.reshape(NG, cb, H, W)

    affine = (weight is not None) or (bias is not None)
    if affine:
        w = jnp.ones((C,), jnp.float32) if weight is None else jnp.asarray(weight, jnp.float32)
        b = jnp.zeros((C,), jnp.float32) if bias is None else jnp.asarray(bias, jnp.float32)
        # Per-channel params in the packed lane layout: (G, 1, cb*W).
        wp = jnp.repeat(w.reshape(G, cb), W, axis=1).reshape(G, 1, L)
        bp = jnp.repeat(b.reshape(G, cb), W, axis=1).reshape(G, 1, L)

    kernel = functools.partial(_box_kernel, cb=cb, W=W, TM=TM, lanes=L,
                               scale=scale, eps=float(eps),
                               affine=affine, normalize=normalize)

    # VMEM budget from the actual buffered blocks + f32 intermediates.
    itm = jnp.dtype(x.dtype).itemsize
    mms = jnp.dtype(matmul_dtype).itemsize
    nops = 2 if normalize else 1
    block_bytes = (2 * cb * H * W * itm          # x block (double-buffered)
                   + 2 * cb * TM * W * itm       # out block (double-buffered)
                   + TM * H * mms                # A (single-buffered)
                   + L * L * mms                 # Bt (single-buffered)
                   + (4 * L * 4 if affine else 0))
    interm_bytes = 4 * ((1 + nops) * H * L       # xp, [x | x*x]
                        + nops * TM * L          # t
                        + 4 * TM * L)            # means / var / y temporaries
    vmem_need = block_bytes + interm_bytes
    vmem_limit = None
    if vmem_need > (16 << 20):                   # smallest default scoped limit
        try:
            cap = int(getattr(pltpu.get_tpu_info(), "vmem_capacity_bytes", 64 << 20))
        except Exception:
            cap = 64 << 20                       # v7x per-TC floor
        vmem_limit = int(min(max(2 * vmem_need, 32 << 20), (cap * 3) // 4))

    def _call(single_buffer_consts):
        kw = {"pipeline_mode": pl.Buffered(1)} if single_buffer_consts else {}
        in_specs = [
            pl.BlockSpec((TM, H), lambda ng, r: (r, 0), **kw),     # A row tile
            pl.BlockSpec((L, L), lambda ng, r: (0, 0), **kw),      # Bt (invariant)
        ]
        inputs = [A, Bt]
        if affine:
            in_specs += [pl.BlockSpec((1, 1, L), lambda ng, r: (ng % G, 0, 0)),
                         pl.BlockSpec((1, 1, L), lambda ng, r: (ng % G, 0, 0))]
            inputs += [wp, bp]
        in_specs.append(pl.BlockSpec((1, cb, H, W), lambda ng, r: (ng, 0, 0, 0)))
        inputs.append(xr)
        return pl.pallas_call(
            kernel,
            out_shape=jax.ShapeDtypeStruct((NG, cb, H, W), x.dtype),
            grid=(NG, R),
            in_specs=in_specs,
            out_specs=pl.BlockSpec((1, cb, TM, W), lambda ng, r: (ng, 0, r, 0)),
            compiler_params=pltpu.CompilerParams(
                dimension_semantics=("parallel", "parallel"),
                vmem_limit_bytes=vmem_limit),
        )(*inputs)

    try:
        outp = _call(True)      # A / Bt single-buffered (grid-invariant consts)
    except Exception:
        outp = _call(False)     # conservative fallback: default double-buffering

    return outp.reshape(N, C, H, W)    # merge-only reshape, free


# ----------------------------------------------------------------------------
# Public entry points
# ----------------------------------------------------------------------------
def avg_pool2d(x, *, base_size=(128, 128), matmul_dtype=jnp.float32):
    """AvgPool2d.forward (fast_imp=False, auto_pad=True, kernel from base_size)."""
    # TODO(synk): fast_imp=True branch (strided cumsum + nearest interpolate) has
    # no clean Pallas equivalent here; only the default integral-image path is
    # implemented.
    return _box_call(x, None, None, base_size=base_size, eps=0.0,
                     normalize=False, matmul_dtype=matmul_dtype)


def local_instance_norm2d(x, weight=None, bias=None, *, base_size=(128, 128),
                          eps=1e-5, matmul_dtype=jnp.float32):
    """(x - BoxAvg(x)) / sqrt(BoxAvg(x^2) - BoxAvg(x)^2 + eps) [+ optional affine].

    matmul_dtype=jnp.bfloat16 is accuracy-safe here (exact 0/1 matrices, f32
    accumulators, f32 area scale) and roughly doubles MXU throughput on
    v6e/v7x (and helps v5e's MXU too); the default stays float32.
    """
    return _box_call(x, weight, bias, base_size=base_size, eps=eps,
                     normalize=True, matmul_dtype=matmul_dtype)


# ----------------------------------------------------------------------------
# Pure-JAX references reproducing the PyTorch cumsum / integral-image math.
# ----------------------------------------------------------------------------
def _ref_avgpool(x, k1, k2):
    N, C, H, W = x.shape
    s = jnp.cumsum(jnp.cumsum(x, axis=-1), axis=-2)
    s = jnp.pad(s, ((0, 0), (0, 0), (1, 0), (1, 0)))
    s1 = s[:, :, :-k1, :-k2]
    s2 = s[:, :, :-k1, k2:]
    s3 = s[:, :, k1:, :-k2]
    s4 = s[:, :, k1:, k2:]
    out = (s4 + s1 - s2 - s3) / (k1 * k2)
    _h, _w = out.shape[2:]
    pt, pb = (H - _h) // 2, (H - _h + 1) // 2
    pleft, pright = (W - _w) // 2, (W - _w + 1) // 2
    return jnp.pad(out, ((0, 0), (0, 0), (pt, pb), (pleft, pright)), mode="edge")


def _ref_local_instance_norm(x, *, base_size, eps):
    N, C, H, W = x.shape
    k1, k2, *_ = _pool_params(H, W, base_size)
    m = _ref_avgpool(x, k1, k2)
    mxx = _ref_avgpool(x * x, k1, k2)
    var = mxx - m * m
    return (x - m) / jnp.sqrt(var + eps)


if __name__ == "__main__":
    # --- shape 1: small W -> channel packing (cb=8, 128-lane blocks) --------
    N, C, H, W = 2, 8, 16, 16
    x = jax.random.normal(jax.random.PRNGKey(0), (N, C, H, W), dtype=jnp.float32)
    k1, k2, *_ = _pool_params(H, W, (128, 128))

    pool = jax.block_until_ready(avg_pool2d(x))
    pool_ref = _ref_avgpool(x, k1, k2)
    assert pool.shape == x.shape and pool.dtype == x.dtype
    err = float(jnp.max(jnp.abs(pool - pool_ref)))
    assert err < 2e-3, f"avg_pool2d max abs error {err}"

    out = jax.block_until_ready(local_instance_norm2d(x, eps=1e-5))
    ref = _ref_local_instance_norm(x, base_size=(128, 128), eps=1e-5)
    assert out.shape == x.shape and out.dtype == x.dtype
    err = float(jnp.max(jnp.abs(out - ref)))
    assert err < 2e-3, f"local_instance_norm2d max abs error {err}"

    wgt = jnp.linspace(0.5, 1.5, C, dtype=jnp.float32)
    bs = jnp.linspace(-0.25, 0.25, C, dtype=jnp.float32)
    out_a = jax.block_until_ready(local_instance_norm2d(x, wgt, bs, eps=1e-5))
    ref_a = ref * wgt[None, :, None, None] + bs[None, :, None, None]
    err = float(jnp.max(jnp.abs(out_a - ref_a)))
    assert err < 2e-3, f"affine max abs error {err}"

    # --- shape 2: lane-dense W (cb=1), no channel packing --------------------
    x2 = jax.random.normal(jax.random.PRNGKey(1), (1, 3, 32, 128), jnp.float32)
    k1b, k2b, *_ = _pool_params(32, 128, (128, 128))
    pool2 = jax.block_until_ready(avg_pool2d(x2))
    err = float(jnp.max(jnp.abs(pool2 - _ref_avgpool(x2, k1b, k2b))))
    assert err < 2e-3, f"avg_pool2d (cb=1) max abs error {err}"

    # --- shape 3: H=256 -> row-tiled grid (TM=128, R=2), even parallel extent
    x3 = jax.random.normal(jax.random.PRNGKey(2), (1, 2, 256, 128), jnp.float32)
    out3 = jax.block_until_ready(local_instance_norm2d(x3, eps=1e-5))
    ref3 = _ref_local_instance_norm(x3, base_size=(128, 128), eps=1e-5)
    err = float(jnp.max(jnp.abs(out3 - ref3)))
    assert err < 2e-3, f"row-tiled norm max abs error {err}"

    print("KERNEL_OK")
</pallas_src>

<mosaic_0001>
module attributes {stable_mosaic.version = 11 : i64} {
  func.func @_box_kernel(%arg0: i32, %arg1: i32, %arg2: memref<16x16xf32, #tpu.memory_space<vmem>>, %arg3: memref<128x128xf32, #tpu.memory_space<vmem>>, %arg4: memref<1x8x16x16xf32, #tpu.memory_space<vmem>>, %arg5: memref<1x8x16x16xf32, #tpu.memory_space<vmem>>) attributes {dimension_semantics = [#tpu.dimension_semantics<parallel>, #tpu.dimension_semantics<parallel>], iteration_bounds = array<i64: 2, 1>, scalar_prefetch = 0 : i64, scratch_operands = 0 : i64, tpu.core_type = #tpu.core_type<tc>, window_params = [{pipeline_mode = #tpu.pipeline_mode<synchronous>, transform_indices = @transform_0, window_bounds = array<i64: 16, 16>}, {pipeline_mode = #tpu.pipeline_mode<synchronous>, transform_indices = @transform_1, window_bounds = array<i64: 128, 128>}, {transform_indices = @transform_2, window_bounds = array<i64: 1, 8, 16, 16>}, {transform_indices = @transform_3, window_bounds = array<i64: 1, 8, 16, 16>}]} {
    %c0 = arith.constant 0 : index
    %c0_0 = arith.constant 0 : index
    %c0_1 = arith.constant 0 : index
    %c0_2 = arith.constant 0 : index
    %0 = vector.load %arg4[%c0, %c0_0, %c0_1, %c0_2] : memref<1x8x16x16xf32, #tpu.memory_space<vmem>>, vector<1x8x16x16xf32>
    %1 = vector.shape_cast %0 : vector<1x8x16x16xf32> to vector<8x16x16xf32>
    %2 = vector.extract_strided_slice %1 {offsets = [0, 0, 0], sizes = [1, 16, 16], strides = [1, 1, 1]} : vector<8x16x16xf32> to vector<1x16x16xf32>
    %3 = vector.shape_cast %2 : vector<1x16x16xf32> to vector<16x16xf32>
    %4 = vector.extract_strided_slice %1 {offsets = [1, 0, 0], sizes = [1, 16, 16], strides = [1, 1, 1]} : vector<8x16x16xf32> to vector<1x16x16xf32>
    %5 = vector.shape_cast %4 : vector<1x16x16xf32> to vector<16x16xf32>
    %6 = vector.extract_strided_slice %1 {offsets = [2, 0, 0], sizes = [1, 16, 16], strides = [1, 1, 1]} : vector<8x16x16xf32> to vector<1x16x16xf32>
    %7 = vector.shape_cast %6 : vector<1x16x16xf32> to vector<16x16xf32>
    %8 = vector.extract_strided_slice %1 {offsets = [3, 0, 0], sizes = [1, 16, 16], strides = [1, 1, 1]} : vector<8x16x16xf32> to vector<1x16x16xf32>
    %9 = vector.shape_cast %8 : vector<1x16x16xf32> to vector<16x16xf32>
    %10 = vector.extract_strided_slice %1 {offsets = [4, 0, 0], sizes = [1, 16, 16], strides = [1, 1, 1]} : vector<8x16x16xf32> to vector<1x16x16xf32>
    %11 = vector.shape_cast %10 : vector<1x16x16xf32> to vector<16x16xf32>
    %12 = vector.extract_strided_slice %1 {offsets = [5, 0, 0], sizes = [1, 16, 16], strides = [1, 1, 1]} : vector<8x16x16xf32> to vector<1x16x16xf32>
    %13 = vector.shape_cast %12 : vector<1x16x16xf32> to vector<16x16xf32>
    %14 = vector.extract_strided_slice %1 {offsets = [6, 0, 0], sizes = [1, 16, 16], strides = [1, 1, 1]} : vector<8x16x16xf32> to vector<1x16x16xf32>
    %15 = vector.shape_cast %14 : vector<1x16x16xf32> to vector<16x16xf32>
    %16 = vector.extract_strided_slice %1 {offsets = [7, 0, 0], sizes = [1, 16, 16], strides = [1, 1, 1]} : vector<8x16x16xf32> to vector<1x16x16xf32>
    %17 = vector.shape_cast %16 : vector<1x16x16xf32> to vector<16x16xf32>
    %18 = tpu.concatenate %3, %5, %7, %9, %11, %13, %15, %17 in 1 : vector<16x16xf32>, vector<16x16xf32>, vector<16x16xf32>, vector<16x16xf32>, vector<16x16xf32>, vector<16x16xf32>, vector<16x16xf32>, vector<16x16xf32> -> vector<16x128xf32>
    %c0_3 = arith.constant 0 : index
    %c0_4 = arith.constant 0 : index
    %19 = vector.load %arg2[%c0_3, %c0_4] : memref<16x16xf32, #tpu.memory_space<vmem>>, vector<16x16xf32>
    %cst = arith.constant dense<0.000000e+00> : vector<16x128xf32>
    %20 = tpu.matmul %19, %18, %cst {dimension_numbers = #tpu.dot_dimension_numbers<[1], [0], [0], [1], [0, 0, 1, 1], [], []>} : vector<16x16xf32>, vector<16x128xf32>, vector<16x128xf32> -> vector<16x128xf32>
    %c0_5 = arith.constant 0 : index
    %c0_6 = arith.constant 0 : index
    %21 = vector.load %arg3[%c0_5, %c0_6] : memref<128x128xf32, #tpu.memory_space<vmem>>, vector<128x128xf32>
    %cst_7 = arith.constant dense<0.000000e+00> : vector<16x128xf32>
    %22 = tpu.matmul %20, %21, %cst_7 {dimension_numbers = #tpu.dot_dimension_numbers<[1], [0], [0], [1], [0, 0, 1, 1], [], []>} : vector<16x128xf32>, vector<128x128xf32>, vector<16x128xf32> -> vector<16x128xf32>
    %cst_8 = arith.constant 1.562500e-02 : f32
    %23 = vector.broadcast %cst_8 : f32 to vector<16x128xf32>
    %24 = arith.mulf %22, %23 : vector<16x128xf32>
    %25 = vector.extract_strided_slice %24 {offsets = [0, 0], sizes = [16, 16], strides = [1, 1]} : vector<16x128xf32> to vector<16x16xf32>
    %c0_9 = arith.constant 0 : index
    %c0_10 = arith.constant 0 : index
    %c0_11 = arith.constant 0 : index
    %c0_12 = arith.constant 0 : index
    %26 = vector.load %arg5[%c0_9, %c0_10, %c0_11, %c0_12] : memref<1x8x16x16xf32, #tpu.memory_space<vmem>>, vector<1x1x16x16xf32>
    %27 = vector.shape_cast %26 : vector<1x1x16x16xf32> to vector<16x16xf32>
    %28 = vector.shape_cast %25 : vector<16x16xf32> to vector<1x1x16x16xf32>
    tpu.vector_store %arg5[%c0_9, %c0_10, %c0_11, %c0_12], %28 {strides = array<i32>} : memref<1x8x16x16xf32, #tpu.memory_space<vmem>>, vector<1x1x16x16xf32>,
    %29 = vector.extract_strided_slice %24 {offsets = [0, 16], sizes = [16, 16], strides = [1, 1]} : vector<16x128xf32> to vector<16x16xf32>
    %c0_13 = arith.constant 0 : index
    %c1 = arith.constant 1 : index
    %c0_14 = arith.constant 0 : index
    %c0_15 = arith.constant 0 : index
    %30 = vector.load %arg5[%c0_13, %c1, %c0_14, %c0_15] : memref<1x8x16x16xf32, #tpu.memory_space<vmem>>, vector<1x1x16x16xf32>
    %31 = vector.shape_cast %30 : vector<1x1x16x16xf32> to vector<16x16xf32>
    %32 = vector.shape_cast %29 : vector<16x16xf32> to vector<1x1x16x16xf32>
    tpu.vector_store %arg5[%c0_13, %c1, %c0_14, %c0_15], %32 {strides = array<i32>} : memref<1x8x16x16xf32, #tpu.memory_space<vmem>>, vector<1x1x16x16xf32>,
    %33 = vector.extract_strided_slice %24 {offsets = [0, 32], sizes = [16, 16], strides = [1, 1]} : vector<16x128xf32> to vector<16x16xf32>
    %c0_16 = arith.constant 0 : index
    %c2 = arith.constant 2 : index
    %c0_17 = arith.constant 0 : index
    %c0_18 = arith.constant 0 : index
    %34 = vector.load %arg5[%c0_16, %c2, %c0_17, %c0_18] : memref<1x8x16x16xf32, #tpu.memory_space<vmem>>, vector<1x1x16x16xf32>
    %35 = vector.shape_cast %34 : vector<1x1x16x16xf32> to vector<16x16xf32>
    %36 = vector.shape_cast %33 : vector<16x16xf32> to vector<1x1x16x16xf32>
    tpu.vector_store %arg5[%c0_16, %c2, %c0_17, %c0_18], %36 {strides = array<i32>} : memref<1x8x16x16xf32, #tpu.memory_space<vmem>>, vector<1x1x16x16xf32>,
    %37 = vector.extract_strided_slice %24 {offsets = [0, 48], sizes = [16, 16], strides = [1, 1]} : vector<16x128xf32> to vector<16x16xf32>
    %c0_19 = arith.constant 0 : index
    %c3 = arith.constant 3 : index
    %c0_20 = arith.constant 0 : index
    %c0_21 = arith.constant 0 : index
    %38 = vector.load %arg5[%c0_19, %c3, %c0_20, %c0_21] : memref<1x8x16x16xf32, #tpu.memory_space<vmem>>, vector<1x1x16x16xf32>
    %39 = vector.shape_cast %38 : vector<1x1x16x16xf32> to vector<16x16xf32>
    %40 = vector.shape_cast %37 : vector<16x16xf32> to vector<1x1x16x16xf32>
    tpu.vector_store %arg5[%c0_19, %c3, %c0_20, %c0_21], %40 {strides = array<i32>} : memref<1x8x16x16xf32, #tpu.memory_space<vmem>>, vector<1x1x16x16xf32>,
    %41 = vector.extract_strided_slice %24 {offsets = [0, 64], sizes = [16, 16], strides = [1, 1]} : vector<16x128xf32> to vector<16x16xf32>
    %c0_22 = arith.constant 0 : index
    %c4 = arith.constant 4 : index
    %c0_23 = arith.constant 0 : index
    %c0_24 = arith.constant 0 : index
    %42 = vector.load %arg5[%c0_22, %c4, %c0_23, %c0_24] : memref<1x8x16x16xf32, #tpu.memory_space<vmem>>, vector<1x1x16x16xf32>
    %43 = vector.shape_cast %42 : vector<1x1x16x16xf32> to vector<16x16xf32>
    %44 = vector.shape_cast %41 : vector<16x16xf32> to vector<1x1x16x16xf32>
    tpu.vector_store %arg5[%c0_22, %c4, %c0_23, %c0_24], %44 {strides = array<i32>} : memref<1x8x16x16xf32, #tpu.memory_space<vmem>>, vector<1x1x16x16xf32>,
    %45 = vector.extract_strided_slice %24 {offsets = [0, 80], sizes = [16, 16], strides = [1, 1]} : vector<16x128xf32> to vector<16x16xf32>
    %c0_25 = arith.constant 0 : index
    %c5 = arith.constant 5 : index
    %c0_26 = arith.constant 0 : index
    %c0_27 = arith.constant 0 : index
    %46 = vector.load %arg5[%c0_25, %c5, %c0_26, %c0_27] : memref<1x8x16x16xf32, #tpu.memory_space<vmem>>, vector<1x1x16x16xf32>
    %47 = vector.shape_cast %46 : vector<1x1x16x16xf32> to vector<16x16xf32>
    %48 = vector.shape_cast %45 : vector<16x16xf32> to vector<1x1x16x16xf32>
    tpu.vector_store %arg5[%c0_25, %c5, %c0_26, %c0_27], %48 {strides = array<i32>} : memref<1x8x16x16xf32, #tpu.memory_space<vmem>>, vector<1x1x16x16xf32>,
    %49 = vector.extract_strided_slice %24 {offsets = [0, 96], sizes = [16, 16], strides = [1, 1]} : vector<16x128xf32> to vector<16x16xf32>
    %c0_28 = arith.constant 0 : index
    %c6 = arith.constant 6 : index
    %c0_29 = arith.constant 0 : index
    %c0_30 = arith.constant 0 : index
    %50 = vector.load %arg5[%c0_28, %c6, %c0_29, %c0_30] : memref<1x8x16x16xf32, #tpu.memory_space<vmem>>, vector<1x1x16x16xf32>
    %51 = vector.shape_cast %50 : vector<1x1x16x16xf32> to vector<16x16xf32>
    %52 = vector.shape_cast %49 : vector<16x16xf32> to vector<1x1x16x16xf32>
    tpu.vector_store %arg5[%c0_28, %c6, %c0_29, %c0_30], %52 {strides = array<i32>} : memref<1x8x16x16xf32, #tpu.memory_space<vmem>>, vector<1x1x16x16xf32>,
    %53 = vector.extract_strided_slice %24 {offsets = [0, 112], sizes = [16, 16], strides = [1, 1]} : vector<16x128xf32> to vector<16x16xf32>
    %c0_31 = arith.constant 0 : index
    %c7 = arith.constant 7 : index
    %c0_32 = arith.constant 0 : index
    %c0_33 = arith.constant 0 : index
    %54 = vector.load %arg5[%c0_31, %c7, %c0_32, %c0_33] : memref<1x8x16x16xf32, #tpu.memory_space<vmem>>, vector<1x1x16x16xf32>
    %55 = vector.shape_cast %54 : vector<1x1x16x16xf32> to vector<16x16xf32>
    %56 = vector.shape_cast %53 : vector<16x16xf32> to vector<1x1x16x16xf32>
    tpu.vector_store %arg5[%c0_31, %c7, %c0_32, %c0_33], %56 {strides = array<i32>} : memref<1x8x16x16xf32, #tpu.memory_space<vmem>>, vector<1x1x16x16xf32>,
    return
  }
  func.func @transform_0(%arg0: i32, %arg1: i32) -> (i32, i32) {
    %c0_i32 = arith.constant 0 : i32
    %c0_i32_0 = arith.constant 0 : i32
    return %arg1, %c0_i32 : i32, i32
  }
  func.func @transform_1(%arg0: i32, %arg1: i32) -> (i32, i32) {
    %c0_i32 = arith.constant 0 : i32
    %c0_i32_0 = arith.constant 0 : i32
    %c0_i32_1 = arith.constant 0 : i32
    return %c0_i32, %c0_i32_0 : i32, i32
  }
  func.func @transform_2(%arg0: i32, %arg1: i32) -> (i32, i32, i32, i32) {
    %c0_i32 = arith.constant 0 : i32
    %c0_i32_0 = arith.constant 0 : i32
    %c0_i32_1 = arith.constant 0 : i32
    %c0_i32_2 = arith.constant 0 : i32
    return %arg0, %c0_i32, %c0_i32_0, %c0_i32_1 : i32, i32, i32, i32
  }
  func.func @transform_3(%arg0: i32, %arg1: i32) -> (i32, i32, i32, i32) {
    %c0_i32 = arith.constant 0 : i32
    %c0_i32_0 = arith.constant 0 : i32
    %c0_i32_1 = arith.constant 0 : i32
    return %arg0, %c0_i32, %arg1, %c0_i32_0 : i32, i32, i32, i32
  }
}

module attributes {stable_mosaic.version = 11 : i64} {
  func.func @_box_kernel(%arg0: i32, %arg1: i32, %arg2: memref<16x16xf32, #tpu.memory_space<vmem>>, %arg3: memref<128x128xf32, #tpu.memory_space<vmem>>, %arg4: memref<1x8x16x16xf32, #tpu.memory_space<vmem>>, %arg5: memref<1x8x16x16xf32, #tpu.memory_space<vmem>>) attributes {dimension_semantics = [#tpu.dimension_semantics<parallel>, #tpu.dimension_semantics<parallel>], iteration_bounds = array<i64: 2, 1>, scalar_prefetch = 0 : i64, scratch_operands = 0 : i64, tpu.core_type = #tpu.core_type<tc>, window_params = [{transform_indices = @transform_0, window_bounds = array<i64: 16, 16>}, {pipeline_mode = #tpu.pipeline_mode<synchronous>, transform_indices = @transform_1, window_bounds = array<i64: 128, 128>}, {transform_indices = @transform_2, window_bounds = array<i64: 1, 8, 16, 16>}, {transform_indices = @transform_3, window_bounds = array<i64: 1, 8, 16, 16>}]} {
    %c0 = arith.constant 0 : index
    %c0_0 = arith.constant 0 : index
    %c0_1 = arith.constant 0 : index
    %c0_2 = arith.constant 0 : index
    %0 = vector.load %arg4[%c0, %c0_0, %c0_1, %c0_2] : memref<1x8x16x16xf32, #tpu.memory_space<vmem>>, vector<1x8x16x16xf32>
    %1 = vector.shape_cast %0 : vector<1x8x16x16xf32> to vector<8x16x16xf32>
    %2 = vector.extract_strided_slice %1 {offsets = [0, 0, 0], sizes = [1, 16, 16], strides = [1, 1, 1]} : vector<8x16x16xf32> to vector<1x16x16xf32>
    %3 = vector.shape_cast %2 : vector<1x16x16xf32> to vector<16x16xf32>
    %4 = vector.extract_strided_slice %1 {offsets = [1, 0, 0], sizes = [1, 16, 16], strides = [1, 1, 1]} : vector<8x16x16xf32> to vector<1x16x16xf32>
    %5 = vector.shape_cast %4 : vector<1x16x16xf32> to vector<16x16xf32>
    %6 = vector.extract_strided_slice %1 {offsets = [2, 0, 0], sizes = [1, 16, 16], strides = [1, 1, 1]} : vector<8x16x16xf32> to vector<1x16x16xf32>
    %7 = vector.shape_cast %6 : vector<1x16x16xf32> to vector<16x16xf32>
    %8 = vector.extract_strided_slice %1 {offsets = [3, 0, 0], sizes = [1, 16, 16], strides = [1, 1, 1]} : vector<8x16x16xf32> to vector<1x16x16xf32>
    %9 = vector.shape_cast %8 : vector<1x16x16xf32> to vector<16x16xf32>
    %10 = vector.extract_strided_slice %1 {offsets = [4, 0, 0], sizes = [1, 16, 16], strides = [1, 1, 1]} : vector<8x16x16xf32> to vector<1x16x16xf32>
    %11 = vector.shape_cast %10 : vector<1x16x16xf32> to vector<16x16xf32>
    %12 = vector.extract_strided_slice %1 {offsets = [5, 0, 0], sizes = [1, 16, 16], strides = [1, 1, 1]} : vector<8x16x16xf32> to vector<1x16x16xf32>
    %13 = vector.shape_cast %12 : vector<1x16x16xf32> to vector<16x16xf32>
    %14 = vector.extract_strided_slice %1 {offsets = [6, 0, 0], sizes = [1, 16, 16], strides = [1, 1, 1]} : vector<8x16x16xf32> to vector<1x16x16xf32>
    %15 = vector.shape_cast %14 : vector<1x16x16xf32> to vector<16x16xf32>
    %16 = vector.extract_strided_slice %1 {offsets = [7, 0, 0], sizes = [1, 16, 16], strides = [1, 1, 1]} : vector<8x16x16xf32> to vector<1x16x16xf32>
    %17 = vector.shape_cast %16 : vector<1x16x16xf32> to vector<16x16xf32>
    %18 = tpu.concatenate %3, %5, %7, %9, %11, %13, %15, %17 in 1 : vector<16x16xf32>, vector<16x16xf32>, vector<16x16xf32>, vector<16x16xf32>, vector<16x16xf32>, vector<16x16xf32>, vector<16x16xf32>, vector<16x16xf32> -> vector<16x128xf32>
    %c0_3 = arith.constant 0 : index
    %c0_4 = arith.constant 0 : index
    %19 = vector.load %arg2[%c0_3, %c0_4] : memref<16x16xf32, #tpu.memory_space<vmem>>, vector<16x16xf32>
    %cst = arith.constant dense<0.000000e+00> : vector<16x128xf32>
    %20 = tpu.matmul %19, %18, %cst {dimension_numbers = #tpu.dot_dimension_numbers<[1], [0], [0], [1], [0, 0, 1, 1], [], []>} : vector<16x16xf32>, vector<16x128xf32>, vector<16x128xf32> -> vector<16x128xf32>
    %c0_5 = arith.constant 0 : index
    %c0_6 = arith.constant 0 : index
    %21 = vector.load %arg3[%c0_5, %c0_6] : memref<128x128xf32, #tpu.memory_space<vmem>>, vector<128x128xf32>
    %cst_7 = arith.constant dense<0.000000e+00> : vector<16x128xf32>
    %22 = tpu.matmul %20, %21, %cst_7 {dimension_numbers = #tpu.dot_dimension_numbers<[1], [0], [0], [1], [0, 0, 1, 1], [], []>} : vector<16x128xf32>, vector<128x128xf32>, vector<16x128xf32> -> vector<16x128xf32>
    %cst_8 = arith.constant 1.562500e-02 : f32
    %23 = vector.broadcast %cst_8 : f32 to vector<16x128xf32>
    %24 = arith.mulf %22, %23 : vector<16x128xf32>
    %25 = vector.extract_strided_slice %24 {offsets = [0, 0], sizes = [16, 16], strides = [1, 1]} : vector<16x128xf32> to vector<16x16xf32>
    %c0_9 = arith.constant 0 : index
    %c0_10 = arith.constant 0 : index
    %c0_11 = arith.constant 0 : index
    %c0_12 = arith.constant 0 : index
    %26 = vector.load %arg5[%c0_9, %c0_10, %c0_11, %c0_12] : memref<1x8x16x16xf32, #tpu.memory_space<vmem>>, vector<1x1x16x16xf32>
    %27 = vector.shape_cast %26 : vector<1x1x16x16xf32> to vector<16x16xf32>
    %28 = vector.shape_cast %25 : vector<16x16xf32> to vector<1x1x16x16xf32>
    tpu.vector_store %arg5[%c0_9, %c0_10, %c0_11, %c0_12], %28 {strides = array<i32>} : memref<1x8x16x16xf32, #tpu.memory_space<vmem>>, vector<1x1x16x16xf32>,
    %29 = vector.extract_strided_slice %24 {offsets = [0, 16], sizes = [16, 16], strides = [1, 1]} : vector<16x128xf32> to vector<16x16xf32>
    %c0_13 = arith.constant 0 : index
    %c1 = arith.constant 1 : index
    %c0_14 = arith.constant 0 : index
    %c0_15 = arith.constant 0 : index
    %30 = vector.load %arg5[%c0_13, %c1, %c0_14, %c0_15] : memref<1x8x16x16xf32, #tpu.memory_space<vmem>>, vector<1x1x16x16xf32>
    %31 = vector.shape_cast %30 : vector<1x1x16x16xf32> to vector<16x16xf32>
    %32 = vector.shape_cast %29 : vector<16x16xf32> to vector<1x1x16x16xf32>
    tpu.vector_store %arg5[%c0_13, %c1, %c0_14, %c0_15], %32 {strides = array<i32>} : memref<1x8x16x16xf32, #tpu.memory_space<vmem>>, vector<1x1x16x16xf32>,
    %33 = vector.extract_strided_slice %24 {offsets = [0, 32], sizes = [16, 16], strides = [1, 1]} : vector<16x128xf32> to vector<16x16xf32>
    %c0_16 = arith.constant 0 : index
    %c2 = arith.constant 2 : index
    %c0_17 = arith.constant 0 : index
    %c0_18 = arith.constant 0 : index
    %34 = vector.load %arg5[%c0_16, %c2, %c0_17, %c0_18] : memref<1x8x16x16xf32, #tpu.memory_space<vmem>>, vector<1x1x16x16xf32>
    %35 = vector.shape_cast %34 : vector<1x1x16x16xf32> to vector<16x16xf32>
    %36 = vector.shape_cast %33 : vector<16x16xf32> to vector<1x1x16x16xf32>
    tpu.vector_store %arg5[%c0_16, %c2, %c0_17, %c0_18], %36 {strides = array<i32>} : memref<1x8x16x16xf32, #tpu.memory_space<vmem>>, vector<1x1x16x16xf32>,
    %37 = vector.extract_strided_slice %24 {offsets = [0, 48], sizes = [16, 16], strides = [1, 1]} : vector<16x128xf32> to vector<16x16xf32>
    %c0_19 = arith.constant 0 : index
    %c3 = arith.constant 3 : index
    %c0_20 = arith.constant 0 : index
    %c0_21 = arith.constant 0 : index
    %38 = vector.load %arg5[%c0_19, %c3, %c0_20, %c0_21] : memref<1x8x16x16xf32, #tpu.memory_space<vmem>>, vector<1x1x16x16xf32>
    %39 = vector.shape_cast %38 : vector<1x1x16x16xf32> to vector<16x16xf32>
    %40 = vector.shape_cast %37 : vector<16x16xf32> to vector<1x1x16x16xf32>
    tpu.vector_store %arg5[%c0_19, %c3, %c0_20, %c0_21], %40 {strides = array<i32>} : memref<1x8x16x16xf32, #tpu.memory_space<vmem>>, vector<1x1x16x16xf32>,
    %41 = vector.extract_strided_slice %24 {offsets = [0, 64], sizes = [16, 16], strides = [1, 1]} : vector<16x128xf32> to vector<16x16xf32>
    %c0_22 = arith.constant 0 : index
    %c4 = arith.constant 4 : index
    %c0_23 = arith.constant 0 : index
    %c0_24 = arith.constant 0 : index
    %42 = vector.load %arg5[%c0_22, %c4, %c0_23, %c0_24] : memref<1x8x16x16xf32, #tpu.memory_space<vmem>>, vector<1x1x16x16xf32>
    %43 = vector.shape_cast %42 : vector<1x1x16x16xf32> to vector<16x16xf32>
    %44 = vector.shape_cast %41 : vector<16x16xf32> to vector<1x1x16x16xf32>
    tpu.vector_store %arg5[%c0_22, %c4, %c0_23, %c0_24], %44 {strides = array<i32>} : memref<1x8x16x16xf32, #tpu.memory_space<vmem>>, vector<1x1x16x16xf32>,
    %45 = vector.extract_strided_slice %24 {offsets = [0, 80], sizes = [16, 16], strides = [1, 1]} : vector<16x128xf32> to vector<16x16xf32>
    %c0_25 = arith.constant 0 : index
    %c5 = arith.constant 5 : index
    %c0_26 = arith.constant 0 : index
    %c0_27 = arith.constant 0 : index
    %46 = vector.load %arg5[%c0_25, %c5, %c0_26, %c0_27] : memref<1x8x16x16xf32, #tpu.memory_space<vmem>>, vector<1x1x16x16xf32>
    %47 = vector.shape_cast %46 : vector<1x1x16x16xf32> to vector<16x16xf32>
    %48 = vector.shape_cast %45 : vector<16x16xf32> to vector<1x1x16x16xf32>
    tpu.vector_store %arg5[%c0_25, %c5, %c0_26, %c0_27], %48 {strides = array<i32>} : memref<1x8x16x16xf32, #tpu.memory_space<vmem>>, vector<1x1x16x16xf32>,
    %49 = vector.extract_strided_slice %24 {offsets = [0, 96], sizes = [16, 16], strides = [1, 1]} : vector<16x128xf32> to vector<16x16xf32>
    %c0_28 = arith.constant 0 : index
    %c6 = arith.constant 6 : index
    %c0_29 = arith.constant 0 : index
    %c0_30 = arith.constant 0 : index
    %50 = vector.load %arg5[%c0_28, %c6, %c0_29, %c0_30] : memref<1x8x16x16xf32, #tpu.memory_space<vmem>>, vector<1x1x16x16xf32>
    %51 = vector.shape_cast %50 : vector<1x1x16x16xf32> to vector<16x16xf32>
    %52 = vector.shape_cast %49 : vector<16x16xf32> to vector<1x1x16x16xf32>
    tpu.vector_store %arg5[%c0_28, %c6, %c0_29, %c0_30], %52 {strides = array<i32>} : memref<1x8x16x16xf32, #tpu.memory_space<vmem>>, vector<1x1x16x16xf32>,
    %53 = vector.extract_strided_slice %24 {offsets = [0, 112], sizes = [16, 16], strides = [1, 1]} : vector<16x128xf32> to vector<16x16xf32>
    %c0_31 = arith.constant 0 : index
    %c7 = arith.constant 7 : index
    %c0_32 = arith.constant 0 : index
    %c0_33 = arith.constant 0 : index
    %54 = vector.load %arg5[%c0_31, %c7, %c0_32, %c0_33] : memref<1x8x16x16xf32, #tpu.memory_space<vmem>>, vector<1x1x16x16xf32>
    %55 = vector.shape_cast %54 : vector<1x1x16x16xf32> to vector<16x16xf32>
    %56 = vector.shape_cast %53 : vector<16x16xf32> to vector<1x1x16x16xf32>
    tpu.vector_store %arg5[%c0_31, %c7, %c0_32, %c0_33], %56 {strides = array<i32>} : memref<1x8x16x16xf32, #tpu.memory_space<vmem>>, vector<1x1x16x16xf32>,
    return
  }
  func.func @transform_0(%arg0: i32, %arg1: i32) -> (i32, i32) {
    %c0_i32 = arith.constant 0 : i32
    %c0_i32_0 = arith.constant 0 : i32
    return %arg1, %c0_i32 : i32, i32
  }
  func.func @transform_1(%arg0: i32, %arg1: i32) -> (i32, i32) {
    %c0_i32 = arith.constant 0 : i32
    %c0_i32_0 = arith.constant 0 : i32
    %c0_i32_1 = arith.constant 0 : i32
    return %c0_i32, %c0_i32_0 : i32, i32
  }
  func.func @transform_2(%arg0: i32, %arg1: i32) -> (i32, i32, i32, i32) {
    %c0_i32 = arith.constant 0 : i32
    %c0_i32_0 = arith.constant 0 : i32
    %c0_i32_1 = arith.constant 0 : i32
    %c0_i32_2 = arith.constant 0 : i32
    return %arg0, %c0_i32, %c0_i32_0, %c0_i32_1 : i32, i32, i32, i32
  }
  func.func @transform_3(%arg0: i32, %arg1: i32) -> (i32, i32, i32, i32) {
    %c0_i32 = arith.constant 0 : i32
    %c0_i32_0 = arith.constant 0 : i32
    %c0_i32_1 = arith.constant 0 : i32
    return %arg0, %c0_i32, %arg1, %c0_i32_0 : i32, i32, i32, i32
  }
}

</mosaic_0001>

<llo_original>
// kernel: tpu_custom_call.1
$region0: #{tpu_custom_call.1}
  #allocation0 [shape = 'u32[]', space=smem, size = 0x4, offset = 0x4, fixed_abs, tag = 'smem constant byte address 0x4 - core index']
  #allocation1 [shape = 'u32[72,128]{1,0:T(1,128)}', space=vmem, size = 0x9000, scoped, tag = 'internal scratch']
  %s0 = inlined_call_operand.hbm [shape: f32[16,16], index: 0, kind: input, shape index: {}]
  %s1 = inlined_call_operand.hbm [shape: f32[128,128], index: 1, kind: input, shape index: {}]
  %s2 = inlined_call_operand.hbm [shape: f32[2,8,16,16], index: 2, kind: input, shape index: {}]
  %s3 = inlined_call_operand.hbm [shape: f32[2,8,16,16], index: 3, kind: output, shape index: {}]
  %s4 = sld [smem:[#allocation0]]
  $region57: #{tpu_custom_call.1} parent=0
    _
  %s6 = ssub.s32 1, %s4
  %s7 = scalar_select 0, %s6, %s4
  $region1: #{tpu_custom_call.1} parent=0
    #allocation2 [shape = 'u8[8192]{0}', space=vmem, size = 0x2000, scoped, tag = 'input window, operand 0, single buffered']
    #allocation3 [shape = 's32[2]{0}', space=sflag, size = 0x8, scoped, tag = 'scoped memory for tpu_custom_call.1']
    #allocation4 [shape = 's32[2]{0}', space=sflag, size = 0x8, scoped, tag = 'scoped memory for tpu_custom_call.1']
    #allocation5 [shape = 'u8[65536]{0}', space=vmem, size = 0x10000, scoped, tag = 'input window, operand 1, single buffered']
    #allocation6 [shape = 's32[1]{0}', space=sflag, size = 0x4, scoped, tag = 'scoped memory for tpu_custom_call.1']
    #allocation7 [shape = 'u8[131072]{0}', space=vmem, size = 0x20000, scoped, tag = 'input window, operand 2']
    #allocation8 [shape = 'u8[131072]{0}', space=vmem, size = 0x20000, scoped, tag = 'output window, operand 0']
    %8 = vsyncpa [#allocation3], 0
    %9 = vsyncpa [#allocation6], 0
    %10 = vsyncpa [#allocation4], 0
    %s11 = scalar_lea.sflag [#allocation4], 1
    %12 = vsyncpa %s11, 0
    loop: start=0, step=1, limit=4
    $region2: #{tpu_custom_call.1} parent=1 // loop_pre_header
      _
    $region3: #{tpu_custom_call.1} parent=1 // loop_header
      %s14 = sphi 0, %s18
      %p15 = scmp.ge.s32.totalorder %s14, 4
      %s21 = sphi 0, %s33
      %s22 = sphi 0, %s29
      %s23 = sphi 0, %s21
      %s24 = sphi 0, %s22
      %s25 = sphi 0, %s23
      %s26 = sphi 0, %s24
      %s36 = sphi 0, %s38
      %s39 = sphi 0, %s36
      %s40 = sphi 0, %s39
      %s56 = sphi 0, %s40
      %s60 = sphi 0, %s60
      %s62 = sphi 0, %s60
      %s63 = sphi 0, %s62
      %s77 = sphi 0, %s63
      %s83 = sphi 0, %s85
      %s86 = sphi 0, %s83
      %s87 = sphi 0, %s86
      %s103 = sphi 0, %s87
      %s111 = sphi 0, %s113
      %s114 = sphi 0, %s111
      %s115 = sphi 0, %s114
      %s131 = sphi 0, %s115
    $region4: #{tpu_custom_call.1} parent=1 // loop_header_branch
      %17 = sbr.rel (%p15) target = $region8
    $region5: #{tpu_custom_call.1} parent=1 // loop_body
      %s19 = ssub.s32 %s14, 1
      %s20 = ssub.s32 %s14, 2
      %s27 = sadd.s32 1, %s22
      %p28 = scmp.ge.s32.totalorder %s27, 1
      %s29 = scalar_select %p28, 0, %s27
      %s30 = sadd.s32 1, %s21
      %s31 = scalar_select %p28, %s30, %s21
      %p32 = scmp.ge.s32.totalorder %s31, 2
      %s33 = scalar_select %p32, 0, %s31
      %s34 = ssub.s32 %s22, %s29
      %p35 = scmp.eq.s32.totalorder %s34, 0
      %s37 = sadd.s32 %s36, 1
      %s38 = scalar_select %p35, %s36, %s37
      %p41 = pneg %p35
      %p42 = scmp.eq.s32.totalorder %s14, 1
      %p43 = por %p41, %p42
      %p44 = scmp.ne.s32.totalorder %s36, %s39
      %p45 = scmp.eq.s32.totalorder %s14, 0
      %p46 = por %p44, %p45
      %p47 = scmp.ne.s32.totalorder %s36, %s39
      %p48 = scmp.eq.s32.totalorder %s19, 1
      %p49 = por %p47, %p48
      %p50 = scmp.ne.s32.totalorder %s39, %s40
      %p51 = scmp.eq.s32.totalorder %s19, 0
      %p52 = por %p50, %p51
      %p53 = scmp.ne.s32.totalorder %s39, %s40
      %p54 = scmp.eq.s32.totalorder %s20, 1
      %p55 = por %p53, %p54
      %p57 = scmp.ne.s32.totalorder %s40, %s56
      %p58 = scmp.eq.s32.totalorder %s20, 0
      %p59 = por %p57, %p58
      %s61 = sadd.s32 %s60, 1
      %p64 = scmp.eq.s32.totalorder %s14, 1
      %p65 = scmp.ne.s32.totalorder %s60, %s62
      %p66 = scmp.eq.s32.totalorder %s14, 0
      %p67 = por %p65, %p66
      %p68 = scmp.ne.s32.totalorder %s60, %s62
      %p69 = scmp.eq.s32.totalorder %s19, 1
      %p70 = por %p68, %p69
      %p71 = scmp.ne.s32.totalorder %s62, %s63
      %p72 = scmp.eq.s32.totalorder %s19, 0
      %p73 = por %p71, %p72
      %p74 = scmp.ne.s32.totalorder %s62, %s63
      %p75 = scmp.eq.s32.totalorder %s20, 1
      %p76 = por %p74, %p75
      %p78 = scmp.ne.s32.totalorder %s63, %s77
      %p79 = scmp.eq.s32.totalorder %s20, 0
      %p80 = por %p78, %p79
      %s81 = ssub.s32 %s21, %s33
      %p82 = scmp.eq.s32.totalorder %s81, 0
      %s84 = sadd.s32 %s83, 1
      %s85 = scalar_select %p82, %s83, %s84
      %p88 = pneg %p82
      %p89 = scmp.eq.s32.totalorder %s14, 1
      %p90 = por %p88, %p89
      %p91 = scmp.ne.s32.totalorder %s83, %s86
      %p92 = scmp.eq.s32.totalorder %s14, 0
      %p93 = por %p91, %p92
      %p94 = scmp.ne.s32.totalorder %s83, %s86
      %p95 = scmp.eq.s32.totalorder %s19, 1
      %p96 = por %p94, %p95
      %p97 = scmp.ne.s32.totalorder %s86, %s87
      %p98 = scmp.eq.s32.totalorder %s19, 0
      %p99 = por %p97, %p98
      %p100 = scmp.ne.s32.totalorder %s86, %s87
      %p101 = scmp.eq.s32.totalorder %s20, 1
      %p102 = por %p100, %p101
      %p104 = scmp.ne.s32.totalorder %s87, %s103
      %p105 = scmp.eq.s32.totalorder %s20, 0
      %p106 = por %p104, %p105
      %s107 = ssub.s32 %s21, %s33
      %s108 = ssub.s32 %s22, %s29
      %s109 = sor.u32 %s107, %s108
      %p110 = scmp.eq.s32.totalorder %s109, 0
      %s112 = sadd.s32 %s111, 1
      %s113 = scalar_select %p110, %s111, %s112
      %p116 = pneg %p110
      %p117 = scmp.eq.s32.totalorder %s14, 1
      %p118 = por %p116, %p117
      %p119 = scmp.ne.s32.totalorder %s111, %s114
      %p120 = scmp.eq.s32.totalorder %s14, 0
      %p121 = por %p119, %p120
      %p122 = scmp.ne.s32.totalorder %s111, %s114
      %p123 = scmp.eq.s32.totalorder %s19, 1
      %p124 = por %p122, %p123
      %p125 = scmp.ne.s32.totalorder %s114, %s115
      %p126 = scmp.eq.s32.totalorder %s19, 0
      %p127 = por %p125, %p126
      %p128 = scmp.ne.s32.totalorder %s114, %s115
      %p129 = scmp.eq.s32.totalorder %s20, 1
      %p130 = por %p128, %p129
      %p132 = scmp.ne.s32.totalorder %s115, %s131
      %p133 = scmp.eq.s32.totalorder %s20, 0
      %p134 = por %p132, %p133
      %p135 = scmp.le.s32.totalorder 1, %s14
      %p136 = scmp.lt.s32.totalorder %s14, 3
      %p137 = pnand %p135, %p136
      %p138 = pneg %p137
      // Predicated region
      $region9: #{tpu_custom_call.1} parent=5 // pred_check
        _
      $region10: #{tpu_custom_call.1} parent=5 // pred_check_branch
        %140 = sbr.rel (%p137) target = $region12
      $region11: #{tpu_custom_call.1} parent=5 // pred_region
        %s141 = ssub.s32 %s14, 1
        // Predicated region
        $region13: #{tpu_custom_call.1} parent=11 // pred_check
          %p142 = pneg %p52
        $region14: #{tpu_custom_call.1} parent=11 // pred_check_branch
          %144 = sbr.rel (%p142) target = $region16
        $region15: #{tpu_custom_call.1} parent=11 // pred_region
          %s145 = smul.u32 2, %s24
          %147 = vsyncadd [#allocation3], 0
          %s148 = smul.addr %s145, 8
          %s149 = scalar_lea.hbm %s0, %s148
          %s150 = sshll.u32 %s149, 4
          %s151 = int_to_ptr.hbm [resolvable:$true] %s150
          %s152 = sshll.u32 [#allocation2], 4
          %s153 = int_to_ptr.vmem [resolvable:$true] %s152
          %158 = dma.hbm_to_vmem [thread:$0]  %s151, 256, %s153, [#allocation3], 128, 128, 8
        $region16: #{tpu_custom_call.1} parent=11 // pred_fallthru
          _
        // Predicated region
        $region17: #{tpu_custom_call.1} parent=11 // pred_check
          %p159 = pneg %p73
        $region18: #{tpu_custom_call.1} parent=11 // pred_check_branch
          %161 = sbr.rel (%p159) target = $region20
        $region19: #{tpu_custom_call.1} parent=11 // pred_region
          %163 = vsyncadd [#allocation6], 0
          %s164 = sshll.u32 %s1, 4
          %s165 = int_to_ptr.hbm [resolvable:$true] %s164
          %s166 = sshll.u32 [#allocation5], 4
          %s167 = int_to_ptr.vmem [resolvable:$true] %s166
          %172 = dma.hbm_to_vmem [thread:$0]  %s165, 2048, %s167, [#allocation6], 128, 128, 8
        $region20: #{tpu_custom_call.1} parent=11 // pred_fallthru
          _
      $region12: #{tpu_custom_call.1} parent=5 // pred_fallthru
        _
      %p173 = scmp.lt.s32.totalorder %s14, 2
      // Predicated region
      $region21: #{tpu_custom_call.1} parent=5 // pred_check
        %p174 = pneg %p173
      $region22: #{tpu_custom_call.1} parent=5 // pred_check_branch
        %176 = sbr.rel (%p174) target = $region24
      $region23: #{tpu_custom_call.1} parent=5 // pred_region
        // Predicated region
        $region25: #{tpu_custom_call.1} parent=23 // pred_check
          %p177 = pneg %p93
        $region26: #{tpu_custom_call.1} parent=23 // pred_check_branch
          %179 = sbr.rel (%p177) target = $region28
        $region27: #{tpu_custom_call.1} parent=23 // pred_region
          %s180 = sand.u32 %s14, 1
          %s181 = scalar_lea.sflag [#allocation3], %s180
          %s182 = sand.u32 %s83, 1
          %s183 = smul.addr %s182, 128
          %s184 = scalar_lea.vmem [#allocation7], %s183
          %186 = vsyncadd %s181, 0
          %s187 = smul.addr %s21, 16
          %s188 = smul.addr %s187, 8
          %s189 = scalar_lea.hbm %s2, %s188
          %s190 = sshll.u32 %s189, 4
          %s191 = int_to_ptr.hbm [resolvable:$true] %s190
          %s192 = sshll.u32 %s184, 4
          %s193 = int_to_ptr.vmem [resolvable:$true] %s192
          %198 = dma.hbm_to_vmem [thread:$0]  %s191, 2048, %s193, %s181, 128, 128, 8
        $region28: #{tpu_custom_call.1} parent=23 // pred_fallthru
          _
      $region24: #{tpu_custom_call.1} parent=5 // pred_fallthru
        _
      %p199 = scmp.le.s32.totalorder 1, %s14
      %p200 = scmp.lt.s32.totalorder %s14, 3
      %p201 = pnand %p199, %p200
      %p202 = pneg %p201
      // Predicated region
      $region29: #{tpu_custom_call.1} parent=5 // pred_check
        _
      $region30: #{tpu_custom_call.1} parent=5 // pred_check_branch
        %204 = sbr.rel (%p201) target = $region32
      $region31: #{tpu_custom_call.1} parent=5 // pred_region
        %s205 = ssub.s32 %s14, 1
        // Predicated region
        $region33: #{tpu_custom_call.1} parent=31 // pred_check
          %p206 = pneg %p52
        $region34: #{tpu_custom_call.1} parent=31 // pred_check_branch
          %208 = sbr.rel (%p206) target = $region36
        $region35: #{tpu_custom_call.1} parent=31 // pred_region
          %210 = dma.done [#allocation3], 256
        $region36: #{tpu_custom_call.1} parent=31 // pred_fallthru
          _
        // Predicated region
        $region37: #{tpu_custom_call.1} parent=31 // pred_check
          %p211 = pneg %p73
        $region38: #{tpu_custom_call.1} parent=31 // pred_check_branch
          %213 = sbr.rel (%p211) target = $region40
        $region39: #{tpu_custom_call.1} parent=31 // pred_region
          %215 = dma.done [#allocation6], 2048
        $region40: #{tpu_custom_call.1} parent=31 // pred_fallthru
          _
        %s216 = sand.u32 %s19, 1
        %s217 = scalar_lea.sflag [#allocation3], %s216
        %s218 = sand.u32 %s86, 1
        %s219 = smul.addr %s218, 128
        %s220 = scalar_lea.vmem [#allocation7], %s219
        // Predicated region
        $region41: #{tpu_custom_call.1} parent=31 // pred_check
          %p221 = pneg %p99
        $region42: #{tpu_custom_call.1} parent=31 // pred_check_branch
          %223 = sbr.rel (%p221) target = $region44
        $region43: #{tpu_custom_call.1} parent=31 // pred_region
          %225 = dma.done %s217, 2048
        $region44: #{tpu_custom_call.1} parent=31 // pred_fallthru
          _
        %p226 = pneg %p52
        %p227 = pneg %p49
        %p228 = pneg %p73
        %p229 = pneg %p70
        %s230 = sand.u32 %s19, 1
        %s231 = scalar_lea.sflag [#allocation3], %s230
        %s232 = sand.u32 %s86, 1
        %s233 = smul.addr %s232, 128
        %s234 = scalar_lea.vmem [#allocation7], %s233
        %p235 = pneg %p99
        %p236 = pneg %p96
        %p237 = pneg %p127
        %p238 = pneg %p124
        %s239 = sand.u32 %s114, 1
        %s240 = scalar_lea.sflag [#allocation4], %s239
        %s241 = sand.u32 %s114, 1
        %s242 = smul.addr %s241, 128
        %s243 = scalar_lea.vmem [#allocation8], %s242
        %s244 = smul.u32 2, %s24
        %s245 = smul.u32 2, %s24
        %v246 = vld [vmem:[%s220] sm:$0xff]
        %v247 = vld [vmem:[%s220 + $0x8] sm:$0xff]
        %v248 = vld [vmem:[%s220 + $0x10] sm:$0xff]
        %v249 = vld [vmem:[%s220 + $0x18] sm:$0xff]
        %v250 = vld [vmem:[%s220 + $0x20] sm:$0xff]
        %v251 = vld [vmem:[%s220 + $0x28] sm:$0xff]
        %v252 = vld [vmem:[%s220 + $0x30] sm:$0xff]
        %v253 = vld [vmem:[%s220 + $0x38] sm:$0xff]
        %v254 = vld [vmem:[%s220 + $0x40] sm:$0xff]
        %v255 = vld [vmem:[%s220 + $0x48] sm:$0xff]
        %v256 = vld [vmem:[%s220 + $0x50] sm:$0xff]
        %v257 = vld [vmem:[%s220 + $0x58] sm:$0xff]
        %v258 = vld [vmem:[%s220 + $0x60] sm:$0xff]
        %v259 = vld [vmem:[%s220 + $0x68] sm:$0xff]
        %v260 = vld [vmem:[%s220 + $0x70] sm:$0xff]
        %v261 = vld [vmem:[%s220 + $0x78] sm:$0xff]
        %264 = vrot.lane.b32.xlu0 %v248, 16
        %v265 = vpop.permute.xlu0 %264
        %266 = vrot.lane.b32.xlu0 %v249, 16
        %v267 = vpop.permute.xlu0 %266
        %272 = vrot.lane.b32.xlu0 %v250, 32
        %v273 = vpop.permute.xlu0 %272
        %274 = vrot.lane.b32.xlu0 %v251, 32
        %v275 = vpop.permute.xlu0 %274
        %280 = vrot.lane.b32.xlu0 %v252, 48
        %v281 = vpop.permute.xlu0 %280
        %282 = vrot.lane.b32.xlu0 %v253, 48
        %v283 = vpop.permute.xlu0 %282
        %288 = vrot.lane.b32.xlu0 %v254, 64
        %v289 = vpop.permute.xlu0 %288
        %290 = vrot.lane.b32.xlu0 %v255, 64
        %v291 = vpop.permute.xlu0 %290
        %296 = vrot.lane.b32.xlu0 %v256, 80
        %v297 = vpop.permute.xlu0 %296
        %298 = vrot.lane.b32.xlu0 %v257, 80
        %v299 = vpop.permute.xlu0 %298
        %304 = vrot.lane.b32.xlu0 %v258, 96
        %v305 = vpop.permute.xlu0 %304
        %306 = vrot.lane.b32.xlu0 %v259, 96
        %v307 = vpop.permute.xlu0 %306
        %312 = vrot.lane.b32.xlu0 %v260, 112
        %v313 = vpop.permute.xlu0 %312
        %314 = vrot.lane.b32.xlu0 %v261, 112
        %v315 = vpop.permute.xlu0 %314
        %vm318 = vcmask 130048
        %v319 = vsel %vm318, %v246, %v265
        %v320 = vsel %vm318, %v247, %v267
        %vm321 = vcmask 261120
        %v322 = vsel %vm321, %v319, %v273
        %v323 = vsel %vm321, %v320, %v275
        %vm324 = vcmask 392192
        %v325 = vsel %vm324, %v322, %v281
        %v326 = vsel %vm324, %v323, %v283
        %vm327 = vcmask 523264
        %v328 = vsel %vm327, %v325, %v289
        %v329 = vsel %vm327, %v326, %v291
        %vm330 = vcmask 654336
        %v331 = vsel %vm330, %v328, %v297
        %v332 = vsel %vm330, %v329, %v299
        %vm333 = vcmask 785408
        %v334 = vsel %vm333, %v331, %v305
        %v335 = vsel %vm333, %v332, %v307
        %vm336 = vcmask 916480
        %v337 = vsel %vm336, %v334, %v313
        %v338 = vsel %vm336, %v335, %v315
        %v339 = vld [vmem:[#allocation2] sm:$0xff]
        %v340 = vld [vmem:[#allocation2 + $0x8] sm:$0xff]
        %v342 = vsel %vm318, %v339, 0
        %v345 = vsel %vm318, %v340, 0
        %347 = vmatpush.msra.mxu0 0.0
        %348 = vmatpush.msra.mxu0 0.0
        %349 = vmatpush.msra.mxu0 0.0
        %350 = vmatpush.msra.mxu0 0.0
        %351 = vmatpush.msra.mxu0 0.0
        %352 = vmatpush.msra.mxu0 0.0
        %353 = vmatpush.msra.mxu0 0.0
        %354 = vmatpush.msra.mxu0 0.0
        %355 = vmatpush.msra.mxu0 0.0
        %356 = vmatpush.msra.mxu0 0.0
        %357 = vmatpush.msra.mxu0 0.0
        %358 = vmatpush.msra.mxu0 0.0
        %359 = vmatpush.msra.mxu0 0.0
        %360 = vmatpush.msra.mxu0 0.0
        %361 = vmatpush.msra.mxu0 %v338
        %362 = vmatpush.msra.mxu0 %v337
        %363 = vmatmul.f32.gmra.mxu0 %v342
        %v364 = vpop.f32.mrf.mxu0
        %v365 = vadd.f32 0.0, %v364
        %366 = vmatmul.f32.gmra.mxu0 %v345
        %v367 = vpop.f32.mrf.mxu0
        %v368 = vadd.f32 0.0, %v367
        %369 = vdwg.mxu0
        %v370 = vld [vmem:[#allocation5] sm:$0xff]
        %v371 = vld [vmem:[#allocation5 + $0x8] sm:$0xff]
        %v372 = vld [vmem:[#allocation5 + $0x10] sm:$0xff]
        %v373 = vld [vmem:[#allocation5 + $0x18] sm:$0xff]
        %v374 = vld [vmem:[#allocation5 + $0x20] sm:$0xff]
        %v375 = vld [vmem:[#allocation5 + $0x28] sm:$0xff]
        %v376 = vld [vmem:[#allocation5 + $0x30] sm:$0xff]
        %v377 = vld [vmem:[#allocation5 + $0x38] sm:$0xff]
        %v378 = vld [vmem:[#allocation5 + $0x40] sm:$0xff]
        %v379 = vld [vmem:[#allocation5 + $0x48] sm:$0xff]
        %v380 = vld [vmem:[#allocation5 + $0x50] sm:$0xff]
        %v381 = vld [vmem:[#allocation5 + $0x58] sm:$0xff]
        %v382 = vld [vmem:[#allocation5 + $0x60] sm:$0xff]
        %v383 = vld [vmem:[#allocation5 + $0x68] sm:$0xff]
        %v384 = vld [vmem:[#allocation5 + $0x70] sm:$0xff]
        %v385 = vld [vmem:[#allocation5 + $0x78] sm:$0xff]
        %386 = vmatpush.msra.mxu0 %v385
        %387 = vmatpush.msra.mxu0 %v384
        %388 = vmatpush.msra.mxu0 %v383
        %389 = vmatpush.msra.mxu0 %v382
        %390 = vmatpush.msra.mxu0 %v381
        %391 = vmatpush.msra.mxu0 %v380
        %392 = vmatpush.msra.mxu0 %v379
        %393 = vmatpush.msra.mxu0 %v378
        %394 = vmatpush.msra.mxu0 %v377
        %395 = vmatpush.msra.mxu0 %v376
        %396 = vmatpush.msra.mxu0 %v375
        %397 = vmatpush.msra.mxu0 %v374
        %398 = vmatpush.msra.mxu0 %v373
        %399 = vmatpush.msra.mxu0 %v372
        %400 = vmatpush.msra.mxu0 %v371
        %401 = vmatpush.msra.mxu0 %v370
        %402 = vmatmul.f32.gmra.mxu0 %v365
        %v403 = vpop.f32.mrf.mxu0
        %v404 = vadd.f32 0.0, %v403
        %405 = vmatmul.f32.gmra.mxu0 %v368
        %v406 = vpop.f32.mrf.mxu0
        %v407 = vadd.f32 0.0, %v406
        %408 = vdwg.mxu0
        %v409 = vmul.f32 %v404, 0.015625
        %v410 = vmul.f32 %v407, 0.015625
        %411 = vst.msk [vmem:[%s243] sm:$0xff] %vm318, %v409
        %412 = vst.msk [vmem:[%s243 + $0x8] sm:$0xff] %vm318, %v410
        %415 = vrot.lane.b32.xlu0 %v409, 112
        %v416 = vpop.permute.xlu0 %415
        %417 = vrot.lane.b32.xlu0 %v410, 112
        %v418 = vpop.permute.xlu0 %417
        %s421 = scalar_lea.vmem %s243, 16 [#allocation8]
        %422 = vst.msk [vmem:[%s421] sm:$0xff] %vm318, %v416
        %423 = vst.msk [vmem:[%s421 + $0x8] sm:$0xff] %vm318, %v418
        %424 = vrot.lane.b32.xlu0 %v409, 96
        %v425 = vpop.permute.xlu0 %424
        %426 = vrot.lane.b32.xlu0 %v410, 96
        %v427 = vpop.permute.xlu0 %426
        %s430 = scalar_lea.vmem %s243, 32 [#allocation8]
        %431 = vst.msk [vmem:[%s430] sm:$0xff] %vm318, %v425
        %432 = vst.msk [vmem:[%s430 + $0x8] sm:$0xff] %vm318, %v427
        %433 = vrot.lane.b32.xlu0 %v409, 80
        %v434 = vpop.permute.xlu0 %433
        %435 = vrot.lane.b32.xlu0 %v410, 80
        %v436 = vpop.permute.xlu0 %435
        %s439 = scalar_lea.vmem %s243, 48 [#allocation8]
        %440 = vst.msk [vmem:[%s439] sm:$0xff] %vm318, %v434
        %441 = vst.msk [vmem:[%s439 + $0x8] sm:$0xff] %vm318, %v436
        %442 = vrot.lane.b32.xlu0 %v409, 64
        %v443 = vpop.permute.xlu0 %442
        %444 = vrot.lane.b32.xlu0 %v410, 64
        %v445 = vpop.permute.xlu0 %444
        %s448 = scalar_lea.vmem %s243, 64 [#allocation8]
        %449 = vst.msk [vmem:[%s448] sm:$0xff] %vm318, %v443
        %450 = vst.msk [vmem:[%s448 + $0x8] sm:$0xff] %vm318, %v445
        %451 = vrot.lane.b32.xlu0 %v409, 48
        %v452 = vpop.permute.xlu0 %451
        %453 = vrot.lane.b32.xlu0 %v410, 48
        %v454 = vpop.permute.xlu0 %453
        %s457 = scalar_lea.vmem %s243, 80 [#allocation8]
        %458 = vst.msk [vmem:[%s457] sm:$0xff] %vm318, %v452
        %459 = vst.msk [vmem:[%s457 + $0x8] sm:$0xff] %vm318, %v454
        %460 = vrot.lane.b32.xlu0 %v409, 32
        %v461 = vpop.permute.xlu0 %460
        %462 = vrot.lane.b32.xlu0 %v410, 32
        %v463 = vpop.permute.xlu0 %462
        %s466 = scalar_lea.vmem %s243, 96 [#allocation8]
        %467 = vst.msk [vmem:[%s466] sm:$0xff] %vm318, %v461
        %468 = vst.msk [vmem:[%s466 + $0x8] sm:$0xff] %vm318, %v463
        %469 = vrot.lane.b32.xlu0 %v409, 16
        %v470 = vpop.permute.xlu0 %469
        %471 = vrot.lane.b32.xlu0 %v410, 16
        %v472 = vpop.permute.xlu0 %471
        %s475 = scalar_lea.vmem %s243, 112 [#allocation8]
        %476 = vst.msk [vmem:[%s475] sm:$0xff] %vm318, %v470
        %477 = vst.msk [vmem:[%s475 + $0x8] sm:$0xff] %vm318, %v472
        %s478 = sand.u32 %s114, 1
        %s479 = scalar_lea.sflag [#allocation4], %s478
        %s480 = sand.u32 %s114, 1
        %s481 = smul.addr %s480, 128
        %s482 = scalar_lea.vmem [#allocation8], %s481
        // Predicated region
        $region45: #{tpu_custom_call.1} parent=31 // pred_check
          %p483 = pneg %p124
        $region46: #{tpu_custom_call.1} parent=31 // pred_check_branch
          %485 = sbr.rel (%p483) target = $region48
        $region47: #{tpu_custom_call.1} parent=31 // pred_region
          %s486 = smul.u32 2, %s24
          %488 = vsyncadd %s479, 0
          %s489 = smul.addr %s23, 16
          %s490 = sadd.s32 %s486, %s489
          %s491 = smul.addr %s490, 8
          %s492 = scalar_lea.hbm %s3, %s491
          %s493 = sshll.u32 %s482, 4
          %s494 = int_to_ptr.vmem [resolvable:$true] %s493
          %s495 = sshll.u32 %s492, 4
          %s496 = int_to_ptr.hbm [resolvable:$true] %s495
          %501 = dma.vmem_to_hbm [thread:$0]  %s494, 2048, %s496, %s479, 128, 128, 8
        $region48: #{tpu_custom_call.1} parent=31 // pred_fallthru
          _
      $region32: #{tpu_custom_call.1} parent=5 // pred_fallthru
        _
      %p502 = scmp.le.s32.totalorder 2, %s14
      // Predicated region
      $region49: #{tpu_custom_call.1} parent=5 // pred_check
        %p503 = pneg %p502
      $region50: #{tpu_custom_call.1} parent=5 // pred_check_branch
        %505 = sbr.rel (%p503) target = $region52
      $region51: #{tpu_custom_call.1} parent=5 // pred_region
        %s506 = ssub.s32 %s14, 2
        // Predicated region
        $region53: #{tpu_custom_call.1} parent=51 // pred_check
          %p507 = pneg %p130
        $region54: #{tpu_custom_call.1} parent=51 // pred_check_branch
          %509 = sbr.rel (%p507) target = $region56
        $region55: #{tpu_custom_call.1} parent=51 // pred_region
          %s510 = sand.u32 %s115, 1
          %s511 = scalar_lea.sflag [#allocation4], %s510
          %s512 = sand.u32 %s115, 1
          %s513 = smul.addr %s512, 128
          %s514 = scalar_lea.vmem [#allocation8], %s513
          %516 = dma.done %s511, 2048
        $region56: #{tpu_custom_call.1} parent=51 // pred_fallthru
          _
      $region52: #{tpu_custom_call.1} parent=5 // pred_fallthru
        _
    $region6: #{tpu_custom_call.1} parent=1 // loop_footer
      %s18 = sadd.s32 1, %s14
    $region7: #{tpu_custom_call.1} parent=1 // loop_footer_branch
      %13 = sbr.rel target = $region3
    $region8: #{tpu_custom_call.1} parent=1 // loop_exit
      _
    %517 = vsyncpa [#allocation3], 1
    %s518 = scalar_lea.sflag [#allocation3], 1
    %519 = vsyncpa %s518, 1
    %520 = vsyncpa [#allocation6], 1
    %521 = vsyncpa [#allocation4], 1
    %s522 = scalar_lea.sflag [#allocation4], 1
    %523 = vsyncpa %s522, 1

// kernel: tpu_custom_call.1
$region0: #{tpu_custom_call.1}
  #allocation0 [shape = 'u32[]', space=smem, size = 0x4, offset = 0x4, fixed_abs, tag = 'smem constant byte address 0x4 - core index']
  #allocation1 [shape = 'u32[72,128]{1,0:T(1,128)}', space=vmem, size = 0x9000, scoped, tag = 'internal scratch']
  %s0 = inlined_call_operand.hbm [shape: f32[16,16], index: 0, kind: input, shape index: {}]
  %s1 = inlined_call_operand.hbm [shape: f32[128,128], index: 1, kind: input, shape index: {}]
  %s2 = inlined_call_operand.hbm [shape: f32[2,8,16,16], index: 2, kind: input, shape index: {}]
  %s3 = inlined_call_operand.hbm [shape: f32[2,8,16,16], index: 3, kind: output, shape index: {}]
  %s4 = sld [smem:[#allocation0]]
  $region57: #{tpu_custom_call.1} parent=0
    _
  %s6 = ssub.s32 1, %s4
  %s7 = scalar_select 0, %s6, %s4
  $region1: #{tpu_custom_call.1} parent=0
    #allocation2 [shape = 'u8[8192]{0}', space=vmem, size = 0x2000, scoped, tag = 'input window, operand 0, single buffered']
    #allocation3 [shape = 's32[2]{0}', space=sflag, size = 0x8, scoped, tag = 'scoped memory for tpu_custom_call.1']
    #allocation4 [shape = 's32[2]{0}', space=sflag, size = 0x8, scoped, tag = 'scoped memory for tpu_custom_call.1']
    #allocation5 [shape = 'u8[65536]{0}', space=vmem, size = 0x10000, scoped, tag = 'input window, operand 1, single buffered']
    #allocation6 [shape = 's32[1]{0}', space=sflag, size = 0x4, scoped, tag = 'scoped memory for tpu_custom_call.1']
    #allocation7 [shape = 'u8[131072]{0}', space=vmem, size = 0x20000, scoped, tag = 'input window, operand 2']
    #allocation8 [shape = 'u8[131072]{0}', space=vmem, size = 0x20000, scoped, tag = 'output window, operand 0']
    %8 = vsyncpa [#allocation3], 0
    %9 = vsyncpa [#allocation6], 0
    %10 = vsyncpa [#allocation4], 0
    %s11 = scalar_lea.sflag [#allocation4], 1
    %12 = vsyncpa %s11, 0
    loop: start=0, step=1, limit=4
    $region2: #{tpu_custom_call.1} parent=1 // loop_pre_header
      _
    $region3: #{tpu_custom_call.1} parent=1 // loop_header
      %s14 = sphi 0, %s18
      %p15 = scmp.ge.s32.totalorder %s14, 4
      %s21 = sphi 0, %s33
      %s22 = sphi 0, %s29
      %s23 = sphi 0, %s21
      %s24 = sphi 0, %s22
      %s25 = sphi 0, %s23
      %s26 = sphi 0, %s24
      %s36 = sphi 0, %s38
      %s39 = sphi 0, %s36
      %s40 = sphi 0, %s39
      %s56 = sphi 0, %s40
      %s60 = sphi 0, %s60
      %s62 = sphi 0, %s60
      %s63 = sphi 0, %s62
      %s77 = sphi 0, %s63
      %s83 = sphi 0, %s85
      %s86 = sphi 0, %s83
      %s87 = sphi 0, %s86
      %s103 = sphi 0, %s87
      %s111 = sphi 0, %s113
      %s114 = sphi 0, %s111
      %s115 = sphi 0, %s114
      %s131 = sphi 0, %s115
    $region4: #{tpu_custom_call.1} parent=1 // loop_header_branch
      %17 = sbr.rel (%p15) target = $region8
    $region5: #{tpu_custom_call.1} parent=1 // loop_body
      %s19 = ssub.s32 %s14, 1
      %s20 = ssub.s32 %s14, 2
      %s27 = sadd.s32 1, %s22
      %p28 = scmp.ge.s32.totalorder %s27, 1
      %s29 = scalar_select %p28, 0, %s27
      %s30 = sadd.s32 1, %s21
      %s31 = scalar_select %p28, %s30, %s21
      %p32 = scmp.ge.s32.totalorder %s31, 2
      %s33 = scalar_select %p32, 0, %s31
      %s34 = ssub.s32 %s22, %s29
      %p35 = scmp.eq.s32.totalorder %s34, 0
      %s37 = sadd.s32 %s36, 1
      %s38 = scalar_select %p35, %s36, %s37
      %p41 = pneg %p35
      %p42 = scmp.eq.s32.totalorder %s14, 1
      %p43 = por %p41, %p42
      %p44 = scmp.ne.s32.totalorder %s36, %s39
      %p45 = scmp.eq.s32.totalorder %s14, 0
      %p46 = por %p44, %p45
      %p47 = scmp.ne.s32.totalorder %s36, %s39
      %p48 = scmp.eq.s32.totalorder %s19, 1
      %p49 = por %p47, %p48
      %p50 = scmp.ne.s32.totalorder %s39, %s40
      %p51 = scmp.eq.s32.totalorder %s19, 0
      %p52 = por %p50, %p51
      %p53 = scmp.ne.s32.totalorder %s39, %s40
      %p54 = scmp.eq.s32.totalorder %s20, 1
      %p55 = por %p53, %p54
      %p57 = scmp.ne.s32.totalorder %s40, %s56
      %p58 = scmp.eq.s32.totalorder %s20, 0
      %p59 = por %p57, %p58
      %s61 = sadd.s32 %s60, 1
      %p64 = scmp.eq.s32.totalorder %s14, 1
      %p65 = scmp.ne.s32.totalorder %s60, %s62
      %p66 = scmp.eq.s32.totalorder %s14, 0
      %p67 = por %p65, %p66
      %p68 = scmp.ne.s32.totalorder %s60, %s62
      %p69 = scmp.eq.s32.totalorder %s19, 1
      %p70 = por %p68, %p69
      %p71 = scmp.ne.s32.totalorder %s62, %s63
      %p72 = scmp.eq.s32.totalorder %s19, 0
      %p73 = por %p71, %p72
      %p74 = scmp.ne.s32.totalorder %s62, %s63
      %p75 = scmp.eq.s32.totalorder %s20, 1
      %p76 = por %p74, %p75
      %p78 = scmp.ne.s32.totalorder %s63, %s77
      %p79 = scmp.eq.s32.totalorder %s20, 0
      %p80 = por %p78, %p79
      %s81 = ssub.s32 %s21, %s33
      %p82 = scmp.eq.s32.totalorder %s81, 0
      %s84 = sadd.s32 %s83, 1
      %s85 = scalar_select %p82, %s83, %s84
      %p88 = pneg %p82
      %p89 = scmp.eq.s32.totalorder %s14, 1
      %p90 = por %p88, %p89
      %p91 = scmp.ne.s32.totalorder %s83, %s86
      %p92 = scmp.eq.s32.totalorder %s14, 0
      %p93 = por %p91, %p92
      %p94 = scmp.ne.s32.totalorder %s83, %s86
      %p95 = scmp.eq.s32.totalorder %s19, 1
      %p96 = por %p94, %p95
      %p97 = scmp.ne.s32.totalorder %s86, %s87
      %p98 = scmp.eq.s32.totalorder %s19, 0
      %p99 = por %p97, %p98
      %p100 = scmp.ne.s32.totalorder %s86, %s87
      %p101 = scmp.eq.s32.totalorder %s20, 1
      %p102 = por %p100, %p101
      %p104 = scmp.ne.s32.totalorder %s87, %s103
      %p105 = scmp.eq.s32.totalorder %s20, 0
      %p106 = por %p104, %p105
      %s107 = ssub.s32 %s21, %s33
      %s108 = ssub.s32 %s22, %s29
      %s109 = sor.u32 %s107, %s108
      %p110 = scmp.eq.s32.totalorder %s109, 0
      %s112 = sadd.s32 %s111, 1
      %s113 = scalar_select %p110, %s111, %s112
      %p116 = pneg %p110
      %p117 = scmp.eq.s32.totalorder %s14, 1
      %p118 = por %p116, %p117
      %p119 = scmp.ne.s32.totalorder %s111, %s114
      %p120 = scmp.eq.s32.totalorder %s14, 0
      %p121 = por %p119, %p120
      %p122 = scmp.ne.s32.totalorder %s111, %s114
      %p123 = scmp.eq.s32.totalorder %s19, 1
      %p124 = por %p122, %p123
      %p125 = scmp.ne.s32.totalorder %s114, %s115
      %p126 = scmp.eq.s32.totalorder %s19, 0
      %p127 = por %p125, %p126
      %p128 = scmp.ne.s32.totalorder %s114, %s115
      %p129 = scmp.eq.s32.totalorder %s20, 1
      %p130 = por %p128, %p129
      %p132 = scmp.ne.s32.totalorder %s115, %s131
      %p133 = scmp.eq.s32.totalorder %s20, 0
      %p134 = por %p132, %p133
      %p135 = scmp.le.s32.totalorder 1, %s14
      %p136 = scmp.lt.s32.totalorder %s14, 3
      %p137 = pnand %p135, %p136
      %p138 = pneg %p137
      // Predicated region
      $region9: #{tpu_custom_call.1} parent=5 // pred_check
        _
      $region10: #{tpu_custom_call.1} parent=5 // pred_check_branch
        %140 = sbr.rel (%p137) target = $region12
      $region11: #{tpu_custom_call.1} parent=5 // pred_region
        %s141 = ssub.s32 %s14, 1
        // Predicated region
        $region13: #{tpu_custom_call.1} parent=11 // pred_check
          %p142 = pneg %p52
        $region14: #{tpu_custom_call.1} parent=11 // pred_check_branch
          %144 = sbr.rel (%p142) target = $region16
        $region15: #{tpu_custom_call.1} parent=11 // pred_region
          %s145 = smul.u32 2, %s24
          %147 = vsyncadd [#allocation3], 0
          %s148 = smul.addr %s145, 8
          %s149 = scalar_lea.hbm %s0, %s148
          %s150 = sshll.u32 %s149, 4
          %s151 = int_to_ptr.hbm [resolvable:$true] %s150
          %s152 = sshll.u32 [#allocation2], 4
          %s153 = int_to_ptr.vmem [resolvable:$true] %s152
          %158 = dma.hbm_to_vmem [thread:$0]  %s151, 256, %s153, [#allocation3], 128, 128, 8
        $region16: #{tpu_custom_call.1} parent=11 // pred_fallthru
          _
        // Predicated region
        $region17: #{tpu_custom_call.1} parent=11 // pred_check
          %p159 = pneg %p73
        $region18: #{tpu_custom_call.1} parent=11 // pred_check_branch
          %161 = sbr.rel (%p159) target = $region20
        $region19: #{tpu_custom_call.1} parent=11 // pred_region
          %163 = vsyncadd [#allocation6], 0
          %s164 = sshll.u32 %s1, 4
          %s165 = int_to_ptr.hbm [resolvable:$true] %s164
          %s166 = sshll.u32 [#allocation5], 4
          %s167 = int_to_ptr.vmem [resolvable:$true] %s166
          %172 = dma.hbm_to_vmem [thread:$0]  %s165, 2048, %s167, [#allocation6], 128, 128, 8
        $region20: #{tpu_custom_call.1} parent=11 // pred_fallthru
          _
      $region12: #{tpu_custom_call.1} parent=5 // pred_fallthru
        _
      %p173 = scmp.lt.s32.totalorder %s14, 2
      // Predicated region
      $region21: #{tpu_custom_call.1} parent=5 // pred_check
        %p174 = pneg %p173
      $region22: #{tpu_custom_call.1} parent=5 // pred_check_branch
        %176 = sbr.rel (%p174) target = $region24
      $region23: #{tpu_custom_call.1} parent=5 // pred_region
        // Predicated region
        $region25: #{tpu_custom_call.1} parent=23 // pred_check
          %p177 = pneg %p93
        $region26: #{tpu_custom_call.1} parent=23 // pred_check_branch
          %179 = sbr.rel (%p177) target = $region28
        $region27: #{tpu_custom_call.1} parent=23 // pred_region
          %s180 = sand.u32 %s14, 1
          %s181 = scalar_lea.sflag [#allocation3], %s180
          %s182 = sand.u32 %s83, 1
          %s183 = smul.addr %s182, 128
          %s184 = scalar_lea.vmem [#allocation7], %s183
          %186 = vsyncadd %s181, 0
          %s187 = smul.addr %s21, 16
          %s188 = smul.addr %s187, 8
          %s189 = scalar_lea.hbm %s2, %s188
          %s190 = sshll.u32 %s189, 4
          %s191 = int_to_ptr.hbm [resolvable:$true] %s190
          %s192 = sshll.u32 %s184, 4
          %s193 = int_to_ptr.vmem [resolvable:$true] %s192
          %198 = dma.hbm_to_vmem [thread:$0]  %s191, 2048, %s193, %s181, 128, 128, 8
        $region28: #{tpu_custom_call.1} parent=23 // pred_fallthru
          _
      $region24: #{tpu_custom_call.1} parent=5 // pred_fallthru
        _
      %p199 = scmp.le.s32.totalorder 1, %s14
      %p200 = scmp.lt.s32.totalorder %s14, 3
      %p201 = pnand %p199, %p200
      %p202 = pneg %p201
      // Predicated region
      $region29: #{tpu_custom_call.1} parent=5 // pred_check
        _
      $region30: #{tpu_custom_call.1} parent=5 // pred_check_branch
        %204 = sbr.rel (%p201) target = $region32
      $region31: #{tpu_custom_call.1} parent=5 // pred_region
        %s205 = ssub.s32 %s14, 1
        // Predicated region
        $region33: #{tpu_custom_call.1} parent=31 // pred_check
          %p206 = pneg %p52
        $region34: #{tpu_custom_call.1} parent=31 // pred_check_branch
          %208 = sbr.rel (%p206) target = $region36
        $region35: #{tpu_custom_call.1} parent=31 // pred_region
          %210 = dma.done [#allocation3], 256
        $region36: #{tpu_custom_call.1} parent=31 // pred_fallthru
          _
        // Predicated region
        $region37: #{tpu_custom_call.1} parent=31 // pred_check
          %p211 = pneg %p73
        $region38: #{tpu_custom_call.1} parent=31 // pred_check_branch
          %213 = sbr.rel (%p211) target = $region40
        $region39: #{tpu_custom_call.1} parent=31 // pred_region
          %215 = dma.done [#allocation6], 2048
        $region40: #{tpu_custom_call.1} parent=31 // pred_fallthru
          _
        %s216 = sand.u32 %s19, 1
        %s217 = scalar_lea.sflag [#allocation3], %s216
        %s218 = sand.u32 %s86, 1
        %s219 = smul.addr %s218, 128
        %s220 = scalar_lea.vmem [#allocation7], %s219
        // Predicated region
        $region41: #{tpu_custom_call.1} parent=31 // pred_check
          %p221 = pneg %p99
        $region42: #{tpu_custom_call.1} parent=31 // pred_check_branch
          %223 = sbr.rel (%p221) target = $region44
        $region43: #{tpu_custom_call.1} parent=31 // pred_region
          %225 = dma.done %s217, 2048
        $region44: #{tpu_custom_call.1} parent=31 // pred_fallthru
          _
        %p226 = pneg %p52
        %p227 = pneg %p49
        %p228 = pneg %p73
        %p229 = pneg %p70
        %s230 = sand.u32 %s19, 1
        %s231 = scalar_lea.sflag [#allocation3], %s230
        %s232 = sand.u32 %s86, 1
        %s233 = smul.addr %s232, 128
        %s234 = scalar_lea.vmem [#allocation7], %s233
        %p235 = pneg %p99
        %p236 = pneg %p96
        %p237 = pneg %p127
        %p238 = pneg %p124
        %s239 = sand.u32 %s114, 1
        %s240 = scalar_lea.sflag [#allocation4], %s239
        %s241 = sand.u32 %s114, 1
        %s242 = smul.addr %s241, 128
        %s243 = scalar_lea.vmem [#allocation8], %s242
        %s244 = smul.u32 2, %s24
        %s245 = smul.u32 2, %s24
        %v246 = vld [vmem:[%s220] sm:$0xff]
        %v247 = vld [vmem:[%s220 + $0x8] sm:$0xff]
        %v248 = vld [vmem:[%s220 + $0x10] sm:$0xff]
        %v249 = vld [vmem:[%s220 + $0x18] sm:$0xff]
        %v250 = vld [vmem:[%s220 + $0x20] sm:$0xff]
        %v251 = vld [vmem:[%s220 + $0x28] sm:$0xff]
        %v252 = vld [vmem:[%s220 + $0x30] sm:$0xff]
        %v253 = vld [vmem:[%s220 + $0x38] sm:$0xff]
        %v254 = vld [vmem:[%s220 + $0x40] sm:$0xff]
        %v255 = vld [vmem:[%s220 + $0x48] sm:$0xff]
        %v256 = vld [vmem:[%s220 + $0x50] sm:$0xff]
        %v257 = vld [vmem:[%s220 + $0x58] sm:$0xff]
        %v258 = vld [vmem:[%s220 + $0x60] sm:$0xff]
        %v259 = vld [vmem:[%s220 + $0x68] sm:$0xff]
        %v260 = vld [vmem:[%s220 + $0x70] sm:$0xff]
        %v261 = vld [vmem:[%s220 + $0x78] sm:$0xff]
        %264 = vrot.lane.b32.xlu0 %v248, 16
        %v265 = vpop.permute.xlu0 %264
        %266 = vrot.lane.b32.xlu0 %v249, 16
        %v267 = vpop.permute.xlu0 %266
        %272 = vrot.lane.b32.xlu0 %v250, 32
        %v273 = vpop.permute.xlu0 %272
        %274 = vrot.lane.b32.xlu0 %v251, 32
        %v275 = vpop.permute.xlu0 %274
        %280 = vrot.lane.b32.xlu0 %v252, 48
        %v281 = vpop.permute.xlu0 %280
        %282 = vrot.lane.b32.xlu0 %v253, 48
        %v283 = vpop.permute.xlu0 %282
        %288 = vrot.lane.b32.xlu0 %v254, 64
        %v289 = vpop.permute.xlu0 %288
        %290 = vrot.lane.b32.xlu0 %v255, 64
        %v291 = vpop.permute.xlu0 %290
        %296 = vrot.lane.b32.xlu0 %v256, 80
        %v297 = vpop.permute.xlu0 %296
        %298 = vrot.lane.b32.xlu0 %v257, 80
        %v299 = vpop.permute.xlu0 %298
        %304 = vrot.lane.b32.xlu0 %v258, 96
        %v305 = vpop.permute.xlu0 %304
        %306 = vrot.lane.b32.xlu0 %v259, 96
        %v307 = vpop.permute.xlu0 %306
        %312 = vrot.lane.b32.xlu0 %v260, 112
        %v313 = vpop.permute.xlu0 %312
        %314 = vrot.lane.b32.xlu0 %v261, 112
        %v315 = vpop.permute.xlu0 %314
        %vm318 = vcmask 130048
        %v319 = vsel %vm318, %v246, %v265
        %v320 = vsel %vm318, %v247, %v267
        %vm321 = vcmask 261120
        %v322 = vsel %vm321, %v319, %v273
        %v323 = vsel %vm321, %v320, %v275
        %vm324 = vcmask 392192
        %v325 = vsel %vm324, %v322, %v281
        %v326 = vsel %vm324, %v323, %v283
        %vm327 = vcmask 523264
        %v328 = vsel %vm327, %v325, %v289
        %v329 = vsel %vm327, %v326, %v291
        %vm330 = vcmask 654336
        %v331 = vsel %vm330, %v328, %v297
        %v332 = vsel %vm330, %v329, %v299
        %vm333 = vcmask 785408
        %v334 = vsel %vm333, %v331, %v305
        %v335 = vsel %vm333, %v332, %v307
        %vm336 = vcmask 916480
        %v337 = vsel %vm336, %v334, %v313
        %v338 = vsel %vm336, %v335, %v315
        %v339 = vld [vmem:[#allocation2] sm:$0xff]
        %v340 = vld [vmem:[#allocation2 + $0x8] sm:$0xff]
        %v342 = vsel %vm318, %v339, 0
        %v345 = vsel %vm318, %v340, 0
        %347 = vmatpush.msra.mxu0 0.0
        %348 = vmatpush.msra.mxu0 0.0
        %349 = vmatpush.msra.mxu0 0.0
        %350 = vmatpush.msra.mxu0 0.0
        %351 = vmatpush.msra.mxu0 0.0
        %352 = vmatpush.msra.mxu0 0.0
        %353 = vmatpush.msra.mxu0 0.0
        %354 = vmatpush.msra.mxu0 0.0
        %355 = vmatpush.msra.mxu0 0.0
        %356 = vmatpush.msra.mxu0 0.0
        %357 = vmatpush.msra.mxu0 0.0
        %358 = vmatpush.msra.mxu0 0.0
        %359 = vmatpush.msra.mxu0 0.0
        %360 = vmatpush.msra.mxu0 0.0
        %361 = vmatpush.msra.mxu0 %v338
        %362 = vmatpush.msra.mxu0 %v337
        %363 = vmatmul.f32.gmra.mxu0 %v342
        %v364 = vpop.f32.mrf.mxu0
        %v365 = vadd.f32 0.0, %v364
        %366 = vmatmul.f32.gmra.mxu0 %v345
        %v367 = vpop.f32.mrf.mxu0
        %v368 = vadd.f32 0.0, %v367
        %369 = vdwg.mxu0
        %v370 = vld [vmem:[#allocation5] sm:$0xff]
        %v371 = vld [vmem:[#allocation5 + $0x8] sm:$0xff]
        %v372 = vld [vmem:[#allocation5 + $0x10] sm:$0xff]
        %v373 = vld [vmem:[#allocation5 + $0x18] sm:$0xff]
        %v374 = vld [vmem:[#allocation5 + $0x20] sm:$0xff]
        %v375 = vld [vmem:[#allocation5 + $0x28] sm:$0xff]
        %v376 = vld [vmem:[#allocation5 + $0x30] sm:$0xff]
        %v377 = vld [vmem:[#allocation5 + $0x38] sm:$0xff]
        %v378 = vld [vmem:[#allocation5 + $0x40] sm:$0xff]
        %v379 = vld [vmem:[#allocation5 + $0x48] sm:$0xff]
        %v380 = vld [vmem:[#allocation5 + $0x50] sm:$0xff]
        %v381 = vld [vmem:[#allocation5 + $0x58] sm:$0xff]
        %v382 = vld [vmem:[#allocation5 + $0x60] sm:$0xff]
        %v383 = vld [vmem:[#allocation5 + $0x68] sm:$0xff]
        %v384 = vld [vmem:[#allocation5 + $0x70] sm:$0xff]
        %v385 = vld [vmem:[#allocation5 + $0x78] sm:$0xff]
        %386 = vmatpush.msra.mxu0 %v385
        %387 = vmatpush.msra.mxu0 %v384
        %388 = vmatpush.msra.mxu0 %v383
        %389 = vmatpush.msra.mxu0 %v382
        %390 = vmatpush.msra.mxu0 %v381
        %391 = vmatpush.msra.mxu0 %v380
        %392 = vmatpush.msra.mxu0 %v379
        %393 = vmatpush.msra.mxu0 %v378
        %394 = vmatpush.msra.mxu0 %v377
        %395 = vmatpush.msra.mxu0 %v376
        %396 = vmatpush.msra.mxu0 %v375
        %397 = vmatpush.msra.mxu0 %v374
        %398 = vmatpush.msra.mxu0 %v373
        %399 = vmatpush.msra.mxu0 %v372
        %400 = vmatpush.msra.mxu0 %v371
        %401 = vmatpush.msra.mxu0 %v370
        %402 = vmatmul.f32.gmra.mxu0 %v365
        %v403 = vpop.f32.mrf.mxu0
        %v404 = vadd.f32 0.0, %v403
        %405 = vmatmul.f32.gmra.mxu0 %v368
        %v406 = vpop.f32.mrf.mxu0
        %v407 = vadd.f32 0.0, %v406
        %408 = vdwg.mxu0
        %v409 = vmul.f32 %v404, 0.015625
        %v410 = vmul.f32 %v407, 0.015625
        %411 = vst.msk [vmem:[%s243] sm:$0xff] %vm318, %v409
        %412 = vst.msk [vmem:[%s243 + $0x8] sm:$0xff] %vm318, %v410
        %415 = vrot.lane.b32.xlu0 %v409, 112
        %v416 = vpop.permute.xlu0 %415
        %417 = vrot.lane.b32.xlu0 %v410, 112
        %v418 = vpop.permute.xlu0 %417
        %s421 = scalar_lea.vmem %s243, 16 [#allocation8]
        %422 = vst.msk [vmem:[%s421] sm:$0xff] %vm318, %v416
        %423 = vst.msk [vmem:[%s421 + $0x8] sm:$0xff] %vm318, %v418
        %424 = vrot.lane.b32.xlu0 %v409, 96
        %v425 = vpop.permute.xlu0 %424
        %426 = vrot.lane.b32.xlu0 %v410, 96
        %v427 = vpop.permute.xlu0 %426
        %s430 = scalar_lea.vmem %s243, 32 [#allocation8]
        %431 = vst.msk [vmem:[%s430] sm:$0xff] %vm318, %v425
        %432 = vst.msk [vmem:[%s430 + $0x8] sm:$0xff] %vm318, %v427
        %433 = vrot.lane.b32.xlu0 %v409, 80
        %v434 = vpop.permute.xlu0 %433
        %435 = vrot.lane.b32.xlu0 %v410, 80
        %v436 = vpop.permute.xlu0 %435
        %s439 = scalar_lea.vmem %s243, 48 [#allocation8]
        %440 = vst.msk [vmem:[%s439] sm:$0xff] %vm318, %v434
        %441 = vst.msk [vmem:[%s439 + $0x8] sm:$0xff] %vm318, %v436
        %442 = vrot.lane.b32.xlu0 %v409, 64
        %v443 = vpop.permute.xlu0 %442
        %444 = vrot.lane.b32.xlu0 %v410, 64
        %v445 = vpop.permute.xlu0 %444
        %s448 = scalar_lea.vmem %s243, 64 [#allocation8]
        %449 = vst.msk [vmem:[%s448] sm:$0xff] %vm318, %v443
        %450 = vst.msk [vmem:[%s448 + $0x8] sm:$0xff] %vm318, %v445
        %451 = vrot.lane.b32.xlu0 %v409, 48
        %v452 = vpop.permute.xlu0 %451
        %453 = vrot.lane.b32.xlu0 %v410, 48
        %v454 = vpop.permute.xlu0 %453
        %s457 = scalar_lea.vmem %s243, 80 [#allocation8]
        %458 = vst.msk [vmem:[%s457] sm:$0xff] %vm318, %v452
        %459 = vst.msk [vmem:[%s457 + $0x8] sm:$0xff] %vm318, %v454
        %460 = vrot.lane.b32.xlu0 %v409, 32
        %v461 = vpop.permute.xlu0 %460
        %462 = vrot.lane.b32.xlu0 %v410, 32
        %v463 = vpop.permute.xlu0 %462
        %s466 = scalar_lea.vmem %s243, 96 [#allocation8]
        %467 = vst.msk [vmem:[%s466] sm:$0xff] %vm318, %v461
        %468 = vst.msk [vmem:[%s466 + $0x8] sm:$0xff] %vm318, %v463
        %469 = vrot.lane.b32.xlu0 %v409, 16
        %v470 = vpop.permute.xlu0 %469
        %471 = vrot.lane.b32.xlu0 %v410, 16
        %v472 = vpop.permute.xlu0 %471
        %s475 = scalar_lea.vmem %s243, 112 [#allocation8]
        %476 = vst.msk [vmem:[%s475] sm:$0xff] %vm318, %v470
        %477 = vst.msk [vmem:[%s475 + $0x8] sm:$0xff] %vm318, %v472
        %s478 = sand.u32 %s114, 1
        %s479 = scalar_lea.sflag [#allocation4], %s478
        %s480 = sand.u32 %s114, 1
        %s481 = smul.addr %s480, 128
        %s482 = scalar_lea.vmem [#allocation8], %s481
        // Predicated region
        $region45: #{tpu_custom_call.1} parent=31 // pred_check
          %p483 = pneg %p124
        $region46: #{tpu_custom_call.1} parent=31 // pred_check_branch
          %485 = sbr.rel (%p483) target = $region48
        $region47: #{tpu_custom_call.1} parent=31 // pred_region
          %s486 = smul.u32 2, %s24
          %488 = vsyncadd %s479, 0
          %s489 = smul.addr %s23, 16
          %s490 = sadd.s32 %s486, %s489
          %s491 = smul.addr %s490, 8
          %s492 = scalar_lea.hbm %s3, %s491
          %s493 = sshll.u32 %s482, 4
          %s494 = int_to_ptr.vmem [resolvable:$true] %s493
          %s495 = sshll.u32 %s492, 4
          %s496 = int_to_ptr.hbm [resolvable:$true] %s495
          %501 = dma.vmem_to_hbm [thread:$0]  %s494, 2048, %s496, %s479, 128, 128, 8
        $region48: #{tpu_custom_call.1} parent=31 // pred_fallthru
          _
      $region32: #{tpu_custom_call.1} parent=5 // pred_fallthru
        _
      %p502 = scmp.le.s32.totalorder 2, %s14
      // Predicated region
      $region49: #{tpu_custom_call.1} parent=5 // pred_check
        %p503 = pneg %p502
      $region50: #{tpu_custom_call.1} parent=5 // pred_check_branch
        %505 = sbr.rel (%p503) target = $region52
      $region51: #{tpu_custom_call.1} parent=5 // pred_region
        %s506 = ssub.s32 %s14, 2
        // Predicated region
        $region53: #{tpu_custom_call.1} parent=51 // pred_check
          %p507 = pneg %p130
        $region54: #{tpu_custom_call.1} parent=51 // pred_check_branch
          %509 = sbr.rel (%p507) target = $region56
        $region55: #{tpu_custom_call.1} parent=51 // pred_region
          %s510 = sand.u32 %s115, 1
          %s511 = scalar_lea.sflag [#allocation4], %s510
          %s512 = sand.u32 %s115, 1
          %s513 = smul.addr %s512, 128
          %s514 = scalar_lea.vmem [#allocation8], %s513
          %516 = dma.done %s511, 2048
        $region56: #{tpu_custom_call.1} parent=51 // pred_fallthru
          _
      $region52: #{tpu_custom_call.1} parent=5 // pred_fallthru
        _
    $region6: #{tpu_custom_call.1} parent=1 // loop_footer
      %s18 = sadd.s32 1, %s14
    $region7: #{tpu_custom_call.1} parent=1 // loop_footer_branch
      %13 = sbr.rel target = $region3
    $region8: #{tpu_custom_call.1} parent=1 // loop_exit
      _
    %517 = vsyncpa [#allocation3], 1
    %s518 = scalar_lea.sflag [#allocation3], 1
    %519 = vsyncpa %s518, 1
    %520 = vsyncpa [#allocation6], 1
    %521 = vsyncpa [#allocation4], 1
    %s522 = scalar_lea.sflag [#allocation4], 1
    %523 = vsyncpa %s522, 1

</llo_original>
